<compile_context>
chip_gen: v7x
topology: tpu7x:2x2x1
jax: 0.10.0
libtpu: 0.0.40
codegen_flags: <defaults>
</compile_context>

<pallas_src>
import math

import jax
import jax.numpy as jnp
import numpy as np
from jax import lax
from jax.experimental import pallas as pl
from jax.experimental.pallas import tpu as pltpu

# ----------------------------- config (small, synthetic) -----------------------------
B = 2              # batch
S = 16             # sequence length (q_len == kv_seq_len, no past_key_value)
H = 64             # hidden_size
NH = 4             # num_attention_heads == num_key_value_heads (groups = 1)
HD = H // NH       # head_dim = 16
RQ = 32            # q_lowranks[layer]
RK = 32            # k_lowranks[layer]
RV = 32            # vo_lowranks[layer]  (v_proj output dim)
VHD = RV // NH     # per-head value dim = 8
GROUPS = 1         # num_key_value_groups
ROPE_BASE = 10000.0
HALF = HD // 2
D2 = NH * HD       # fused q/k lane width (= 64)
ROWS = NH * B * S  # attention-core rows (= 128), row order (head, batch, seq)

_VMEM = (pltpu.MemorySpace.VMEM if hasattr(pltpu, "MemorySpace")
         else pltpu.TPUMemorySpace.VMEM)   # fallback for older jax spellings


# ----------------------------- Pallas kernel -----------------------------
def llama_attn_kernel(x_ref, wq1_ref, wk1_ref, wq2f_ref, wk2f_ref, wv_ref, wo_ref,
                      cos_ref, sin_ref, mask_ref, out_ref):
    # x_ref:    (B*S, H)                 folded-batch activation slab
    # wq1_ref:  (H, RQ)   wk1_ref: (H, RK)   pre-transposed low-rank stage 1
    # wq2f_ref: (RQ, 2*NH*HD)=(32,128)   [W2 | rotate_half(W2)], 1/sqrt(HD) folded in
    # wk2f_ref: (RK, 2*NH*HD)=(32,128)   [W2 | rotate_half(W2)]
    # wv_ref:   (H, RV)                  fused value projection (all heads)
    # wo_ref:   (RV, H)                  fused output projection (all heads)
    # cos_ref / sin_ref: (B*S, NH*HD)    RoPE tables pre-tiled over batch & heads
    # mask_ref: (NH*B*S, NH*B*S)=(128,128) block-diagonal additive causal mask
    # out_ref:  (B*S, H)
    x = x_ref[...]
    cos2 = cos_ref[...]
    sin2 = sin_ref[...]

    # ---- low-rank stage-1 projections (MXU, full 32-row slab) ----
    q_low = jnp.dot(x, wq1_ref[...], preferred_element_type=jnp.float32)      # (32, RQ)
    k_low = jnp.dot(x, wk1_ref[...], preferred_element_type=jnp.float32)      # (32, RK)

    # ---- fused stage-2: ONE 128-lane-wide dot each, producing [plain | rotate_half] ----
    q_all = jnp.dot(q_low, wq2f_ref[...], preferred_element_type=jnp.float32)  # (32, 128)
    k_all = jnp.dot(k_low, wk2f_ref[...], preferred_element_type=jnp.float32)  # (32, 128)

    # ---- RoPE on the fused lane-dense slab (pure VPU; rotate_half pre-folded) ----
    q_rope = q_all[:, :D2] * cos2 + q_all[:, D2:] * sin2      # (32, 64), lanes (head, d)
    k_rope = k_all[:, :D2] * cos2 + k_all[:, D2:] * sin2      # (32, 64)

    # ---- fused value projection (all heads at once) ----
    v_all = jnp.dot(x, wv_ref[...], preferred_element_type=jnp.float32)        # (32, RV)

    # ---- relayout heads from lanes into rows: rows ordered (head, batch, seq) ----
    # (small sublane stacking of per-head lane slices; avoids minor-dim reshapes)
    q3 = jnp.concatenate([q_rope[:, h * HD:(h + 1) * HD] for h in range(NH)], axis=0)    # (128, 16)
    k3 = jnp.concatenate([k_rope[:, h * HD:(h + 1) * HD] for h in range(NH)], axis=0)    # (128, 16)
    v3 = jnp.concatenate([v_all[:, h * VHD:(h + 1) * VHD] for h in range(NH)], axis=0)   # (128, 8)

    # ---- single batched attention core over all (batch, head) pairs ----
    scores = lax.dot_general(q3, k3, (((1,), (1,)), ((), ())),
                             preferred_element_type=jnp.float32)               # (128, 128)
    scores = scores + mask_ref[...]           # block-diag causal mask (-1e9 off-block)
    scores = scores - jnp.max(scores, axis=-1, keepdims=True)
    p = jnp.exp(scores)                       # off-block terms underflow to exactly 0
    denom = jnp.sum(p, axis=-1, keepdims=True)
    inv = pl.reciprocal(denom, approx=True)   # EUP slot
    inv = inv * (2.0 - denom * inv)           # one Newton step -> f32 accuracy
    p = p * inv

    attn = jnp.dot(p, v3, preferred_element_type=jnp.float32)                  # (128, VHD)

    # ---- heads back into lanes: (batch, seq) x (head, v_dim) == o_proj input layout ----
    attn2 = jnp.concatenate([attn[h * B * S:(h + 1) * B * S, :] for h in range(NH)],
                            axis=1)                                            # (32, RV)

    # ---- fused output projection; store the dot result directly (no concat / reshuffle) ----
    out_ref[...] = jnp.dot(attn2, wo_ref[...], preferred_element_type=jnp.float32)  # (32, H)


# ----------------------------- one-time per-layer weight folding -----------------------------
def fold_params(wq1, wq2, wk1, wk2, wv, wo, cos_tab, sin_tab, mask):
    """Host-side folding hoisted OUT of the jitted per-call wrapper (run once per layer).

    Folds: transposes to (in, out); 1/sqrt(head_dim) into the q stage-2 weight;
    rotate_half into a stacked copy of the stage-2 weights; RoPE tables tiled to the
    fused (B*S, NH*HD) slab; and the (S, S) additive mask expanded to the (128, 128)
    block-diagonal mask used by the batched attention core.
    """
    scale = 1.0 / math.sqrt(HD)

    def rot_cols(w):  # (R, NH*HD): fold rotate_half of the output features into columns
        wh = w.reshape(w.shape[0], NH, HD)
        return jnp.concatenate([-wh[..., HALF:], wh[..., :HALF]], axis=-1).reshape(w.shape)

    wq1t = wq1.T                                              # (H, RQ)
    wk1t = wk1.T                                              # (H, RK)
    wq2t = wq2.T * scale                                      # (RQ, NH*HD), scale folded
    wk2t = wk2.T                                              # (RK, NH*HD)
    wq2f = jnp.concatenate([wq2t, rot_cols(wq2t)], axis=-1)   # (RQ, 2*NH*HD) = (32, 128)
    wk2f = jnp.concatenate([wk2t, rot_cols(wk2t)], axis=-1)   # (RK, 2*NH*HD) = (32, 128)
    wvt = wv.T                                                # (H, RV)
    wot = wo.T                                                # (RV, H)

    # RoPE tables tiled over heads (lanes) and batch (rows): (B*S, NH*HD)
    cos2 = jnp.tile(jnp.tile(cos_tab, (1, NH)), (B, 1))
    sin2 = jnp.tile(jnp.tile(sin_tab, (1, NH)), (B, 1))

    # Block-diagonal additive mask, rows/cols ordered (head, batch, seq).
    # Off-(batch,head)-block entries use a large FINITE value (-1e9) so the
    # max-subtraction path can never produce NaNs; they exp-underflow to exact 0.
    idx = jnp.arange(ROWS)
    rh = idx // (B * S)
    rb = (idx // S) % B
    rs = idx % S
    same = (rb[:, None] == rb[None, :]) & (rh[:, None] == rh[None, :])
    mask_big = jnp.where(same, mask[rs[:, None], rs[None, :]], jnp.float32(-1e9))

    return (wq1t, wk1t, wq2f, wk2f, wvt, wot, cos2, sin2, mask_big)


# ----------------------------- jitted per-call wrapper -----------------------------
@jax.jit
def llama_attention_pallas(x, folded):
    """x: (B, S, H) -> attn_output: (B, S, H).  `folded` comes from fold_params()."""
    x_flat = x.reshape(B * S, H)
    vmem = pl.BlockSpec(memory_space=_VMEM)
    out_flat = pl.pallas_call(
        llama_attn_kernel,
        out_shape=jax.ShapeDtypeStruct((B * S, H), jnp.float32),
        in_specs=[vmem] * (1 + len(folded)),
        out_specs=vmem,
    )(x_flat, *folded)
    return out_flat.reshape(B, S, H)


# ----------------------------- glue: RoPE tables, mask, reference -----------------------------
def make_rope(seq_len, dim):
    inv_freq = 1.0 / (ROPE_BASE ** (jnp.arange(0, dim, 2, dtype=jnp.float32) / dim))
    t = jnp.arange(seq_len, dtype=jnp.float32)
    freqs = jnp.outer(t, inv_freq)                  # (S, dim/2)
    emb = jnp.concatenate([freqs, freqs], axis=-1)  # (S, dim)
    return jnp.cos(emb), jnp.sin(emb)


def rotate_half(x):
    half = x.shape[-1] // 2
    return jnp.concatenate([-x[..., half:], x[..., :half]], axis=-1)


def reference_forward(x, wq1, wq2, wk1, wk2, wv, wo, cos_tab, sin_tab, mask):
    """Pure-JAX mirror of the PyTorch forward (pretraining_tp == 1, no cache)."""
    q = x @ wq1.T @ wq2.T                                   # (B, S, NH*HD)
    k = x @ wk1.T @ wk2.T                                   # (B, S, NH*HD)
    v = x @ wv.T                                            # (B, S, RV)
    q = q.reshape(B, S, NH, HD).transpose(0, 2, 1, 3)       # (B, NH, S, HD)
    k = k.reshape(B, S, NH, HD).transpose(0, 2, 1, 3)
    v = v.reshape(B, S, NH, VHD).transpose(0, 2, 1, 3)      # (B, NH, S, VHD)
    cos = cos_tab[None, None]                               # (1, 1, S, HD)
    sin = sin_tab[None, None]
    q = q * cos + rotate_half(q) * sin
    k = k * cos + rotate_half(k) * sin
    scores = jnp.einsum('bhqd,bhkd->bhqk', q, k) / math.sqrt(HD)
    scores = scores + mask[None, None]
    p = jax.nn.softmax(scores.astype(jnp.float32), axis=-1)
    attn = jnp.einsum('bhqk,bhkd->bhqd', p, v)              # (B, NH, S, VHD)
    attn = attn.transpose(0, 2, 1, 3).reshape(B, S, NH * VHD)
    return attn @ wo.T


# ----------------------------- main -----------------------------
if __name__ == "__main__":
    key = jax.random.PRNGKey(0)
    keys = jax.random.split(key, 8)

    # deterministic synthetic parameters (PyTorch Linear convention: (out, in))
    x   = jax.random.normal(keys[0], (B, S, H), dtype=jnp.float32)
    wq1 = jax.random.normal(keys[1], (RQ, H), dtype=jnp.float32) * 0.05   # SVD w1
    wq2 = jax.random.normal(keys[2], (NH * HD, RQ), dtype=jnp.float32) * 0.05
    wk1 = jax.random.normal(keys[3], (RK, H), dtype=jnp.float32) * 0.05
    wk2 = jax.random.normal(keys[4], (NH * HD, RK), dtype=jnp.float32) * 0.05
    wv  = jax.random.normal(keys[5], (RV, H), dtype=jnp.float32) * 0.05
    wo  = jax.random.normal(keys[6], (H, RV * GROUPS), dtype=jnp.float32) * 0.05

    # RoPE cos/sin tables (position_ids = arange(S)) and the additive causal mask.
    cos_tab, sin_tab = make_rope(S, HD)                     # (S, HD) each
    mask = jnp.where(jnp.tril(jnp.ones((S, S), dtype=bool)), 0.0, -1e9).astype(jnp.float32)

    # One-time (per-layer) weight folding — deliberately outside the jitted call.
    folded = fold_params(wq1, wq2, wk1, wk2, wv, wo, cos_tab, sin_tab, mask)

    out = llama_attention_pallas(x, folded)
    out = jax.block_until_ready(out)

    ref = reference_forward(x, wq1, wq2, wk1, wk2, wv, wo, cos_tab, sin_tab, mask)
    # EUP reciprocal + one Newton step and restructured (mathematically identical)
    # weight folding: f32-level agreement, just not bit-exact.
    np.testing.assert_allclose(np.asarray(out), np.asarray(ref), rtol=1e-3, atol=1e-4)

    # TODO(synk): past_key_value / use_cache KV caching, pretraining_tp > 1 sliced
    # projections, and output_attentions weight return are config branches not exercised.
    print("KERNEL_OK")
</pallas_src>

<mosaic_0001>
module attributes {stable_mosaic.version = 11 : i64} {
  func.func @llama_attn_kernel(%arg0: memref<32x64xf32, #tpu.memory_space<vmem>>, %arg1: memref<64x32xf32, #tpu.memory_space<vmem>>, %arg2: memref<64x32xf32, #tpu.memory_space<vmem>>, %arg3: memref<32x128xf32, #tpu.memory_space<vmem>>, %arg4: memref<32x128xf32, #tpu.memory_space<vmem>>, %arg5: memref<64x32xf32, #tpu.memory_space<vmem>>, %arg6: memref<32x64xf32, #tpu.memory_space<vmem>>, %arg7: memref<32x64xf32, #tpu.memory_space<vmem>>, %arg8: memref<32x64xf32, #tpu.memory_space<vmem>>, %arg9: memref<128x128xf32, #tpu.memory_space<vmem>>, %arg10: memref<32x64xf32, #tpu.memory_space<vmem>>) attributes {dimension_semantics = [], scalar_prefetch = 0 : i64, scratch_operands = 0 : i64, tpu.core_type = #tpu.core_type<tc>} {
    %c0 = arith.constant 0 : index
    %c0_0 = arith.constant 0 : index
    %0 = vector.load %arg0[%c0, %c0_0] : memref<32x64xf32, #tpu.memory_space<vmem>>, vector<32x64xf32>
    %c0_1 = arith.constant 0 : index
    %c0_2 = arith.constant 0 : index
    %1 = vector.load %arg7[%c0_1, %c0_2] : memref<32x64xf32, #tpu.memory_space<vmem>>, vector<32x64xf32>
    %c0_3 = arith.constant 0 : index
    %c0_4 = arith.constant 0 : index
    %2 = vector.load %arg8[%c0_3, %c0_4] : memref<32x64xf32, #tpu.memory_space<vmem>>, vector<32x64xf32>
    %c0_5 = arith.constant 0 : index
    %c0_6 = arith.constant 0 : index
    %3 = vector.load %arg1[%c0_5, %c0_6] : memref<64x32xf32, #tpu.memory_space<vmem>>, vector<64x32xf32>
    %cst = arith.constant dense<0.000000e+00> : vector<32x32xf32>
    %4 = tpu.matmul %0, %3, %cst {dimension_numbers = #tpu.dot_dimension_numbers<[1], [0], [0], [1], [0, 0, 1, 1], [], []>} : vector<32x64xf32>, vector<64x32xf32>, vector<32x32xf32> -> vector<32x32xf32>
    %c0_7 = arith.constant 0 : index
    %c0_8 = arith.constant 0 : index
    %5 = vector.load %arg2[%c0_7, %c0_8] : memref<64x32xf32, #tpu.memory_space<vmem>>, vector<64x32xf32>
    %cst_9 = arith.constant dense<0.000000e+00> : vector<32x32xf32>
    %6 = tpu.matmul %0, %5, %cst_9 {dimension_numbers = #tpu.dot_dimension_numbers<[1], [0], [0], [1], [0, 0, 1, 1], [], []>} : vector<32x64xf32>, vector<64x32xf32>, vector<32x32xf32> -> vector<32x32xf32>
    %c0_10 = arith.constant 0 : index
    %c0_11 = arith.constant 0 : index
    %7 = vector.load %arg3[%c0_10, %c0_11] : memref<32x128xf32, #tpu.memory_space<vmem>>, vector<32x128xf32>
    %cst_12 = arith.constant dense<0.000000e+00> : vector<32x128xf32>
    %8 = tpu.matmul %4, %7, %cst_12 {dimension_numbers = #tpu.dot_dimension_numbers<[1], [0], [0], [1], [0, 0, 1, 1], [], []>} : vector<32x32xf32>, vector<32x128xf32>, vector<32x128xf32> -> vector<32x128xf32>
    %c0_13 = arith.constant 0 : index
    %c0_14 = arith.constant 0 : index
    %9 = vector.load %arg4[%c0_13, %c0_14] : memref<32x128xf32, #tpu.memory_space<vmem>>, vector<32x128xf32>
    %cst_15 = arith.constant dense<0.000000e+00> : vector<32x128xf32>
    %10 = tpu.matmul %6, %9, %cst_15 {dimension_numbers = #tpu.dot_dimension_numbers<[1], [0], [0], [1], [0, 0, 1, 1], [], []>} : vector<32x32xf32>, vector<32x128xf32>, vector<32x128xf32> -> vector<32x128xf32>
    %11 = vector.extract_strided_slice %8 {offsets = [0, 0], sizes = [32, 64], strides = [1, 1]} : vector<32x128xf32> to vector<32x64xf32>
    %12 = arith.mulf %11, %1 : vector<32x64xf32>
    %13 = vector.extract_strided_slice %8 {offsets = [0, 64], sizes = [32, 64], strides = [1, 1]} : vector<32x128xf32> to vector<32x64xf32>
    %14 = arith.mulf %13, %2 : vector<32x64xf32>
    %15 = arith.addf %12, %14 : vector<32x64xf32>
    %16 = vector.extract_strided_slice %10 {offsets = [0, 0], sizes = [32, 64], strides = [1, 1]} : vector<32x128xf32> to vector<32x64xf32>
    %17 = arith.mulf %16, %1 : vector<32x64xf32>
    %18 = vector.extract_strided_slice %10 {offsets = [0, 64], sizes = [32, 64], strides = [1, 1]} : vector<32x128xf32> to vector<32x64xf32>
    %19 = arith.mulf %18, %2 : vector<32x64xf32>
    %20 = arith.addf %17, %19 : vector<32x64xf32>
    %c0_16 = arith.constant 0 : index
    %c0_17 = arith.constant 0 : index
    %21 = vector.load %arg5[%c0_16, %c0_17] : memref<64x32xf32, #tpu.memory_space<vmem>>, vector<64x32xf32>
    %cst_18 = arith.constant dense<0.000000e+00> : vector<32x32xf32>
    %22 = tpu.matmul %0, %21, %cst_18 {dimension_numbers = #tpu.dot_dimension_numbers<[1], [0], [0], [1], [0, 0, 1, 1], [], []>} : vector<32x64xf32>, vector<64x32xf32>, vector<32x32xf32> -> vector<32x32xf32>
    %23 = vector.extract_strided_slice %15 {offsets = [0, 0], sizes = [32, 16], strides = [1, 1]} : vector<32x64xf32> to vector<32x16xf32>
    %24 = vector.extract_strided_slice %15 {offsets = [0, 16], sizes = [32, 16], strides = [1, 1]} : vector<32x64xf32> to vector<32x16xf32>
    %25 = vector.extract_strided_slice %15 {offsets = [0, 32], sizes = [32, 16], strides = [1, 1]} : vector<32x64xf32> to vector<32x16xf32>
    %26 = vector.extract_strided_slice %15 {offsets = [0, 48], sizes = [32, 16], strides = [1, 1]} : vector<32x64xf32> to vector<32x16xf32>
    %27 = tpu.concatenate %23, %24, %25, %26 in 0 : vector<32x16xf32>, vector<32x16xf32>, vector<32x16xf32>, vector<32x16xf32> -> vector<128x16xf32>
    %28 = vector.extract_strided_slice %20 {offsets = [0, 0], sizes = [32, 16], strides = [1, 1]} : vector<32x64xf32> to vector<32x16xf32>
    %29 = vector.extract_strided_slice %20 {offsets = [0, 16], sizes = [32, 16], strides = [1, 1]} : vector<32x64xf32> to vector<32x16xf32>
    %30 = vector.extract_strided_slice %20 {offsets = [0, 32], sizes = [32, 16], strides = [1, 1]} : vector<32x64xf32> to vector<32x16xf32>
    %31 = vector.extract_strided_slice %20 {offsets = [0, 48], sizes = [32, 16], strides = [1, 1]} : vector<32x64xf32> to vector<32x16xf32>
    %32 = tpu.concatenate %28, %29, %30, %31 in 0 : vector<32x16xf32>, vector<32x16xf32>, vector<32x16xf32>, vector<32x16xf32> -> vector<128x16xf32>
    %33 = vector.extract_strided_slice %22 {offsets = [0, 0], sizes = [32, 8], strides = [1, 1]} : vector<32x32xf32> to vector<32x8xf32>
    %34 = vector.extract_strided_slice %22 {offsets = [0, 8], sizes = [32, 8], strides = [1, 1]} : vector<32x32xf32> to vector<32x8xf32>
    %35 = vector.extract_strided_slice %22 {offsets = [0, 16], sizes = [32, 8], strides = [1, 1]} : vector<32x32xf32> to vector<32x8xf32>
    %36 = vector.extract_strided_slice %22 {offsets = [0, 24], sizes = [32, 8], strides = [1, 1]} : vector<32x32xf32> to vector<32x8xf32>
    %37 = tpu.concatenate %33, %34, %35, %36 in 0 : vector<32x8xf32>, vector<32x8xf32>, vector<32x8xf32>, vector<32x8xf32> -> vector<128x8xf32>
    %cst_19 = arith.constant dense<0.000000e+00> : vector<128x128xf32>
    %38 = tpu.matmul %27, %32, %cst_19 {dimension_numbers = #tpu.dot_dimension_numbers<[1], [1], [0], [0], [0, 0, 1, 0], [], []>} : vector<128x16xf32>, vector<128x16xf32>, vector<128x128xf32> -> vector<128x128xf32>
    %c0_20 = arith.constant 0 : index
    %c0_21 = arith.constant 0 : index
    %39 = vector.load %arg9[%c0_20, %c0_21] : memref<128x128xf32, #tpu.memory_space<vmem>>, vector<128x128xf32>
    %40 = arith.addf %38, %39 : vector<128x128xf32>
    %cst_22 = arith.constant dense<0xFF800000> : vector<128xf32>
    %41 = vector.multi_reduction <maximumf>, %40, %cst_22 [1] : vector<128x128xf32> to vector<128xf32>
    %42 = vector.shape_cast %41 : vector<128xf32> to vector<128x1xf32>
    %43 = vector.broadcast %42 : vector<128x1xf32> to vector<128x128xf32>
    %44 = arith.subf %40, %43 : vector<128x128xf32>
    %45 = math.exp %44 : vector<128x128xf32>
    %cst_23 = arith.constant dense<0.000000e+00> : vector<128xf32>
    %46 = vector.multi_reduction <add>, %45, %cst_23 [1] : vector<128x128xf32> to vector<128xf32>
    %47 = vector.shape_cast %46 : vector<128xf32> to vector<128x1xf32>
    %48 = tpu.reciprocal %47 {approx = true} : vector<128x1xf32> -> vector<128x1xf32>
    %49 = arith.mulf %47, %48 : vector<128x1xf32>
    %cst_24 = arith.constant 2.000000e+00 : f32
    %50 = vector.broadcast %cst_24 : f32 to vector<128x1xf32>
    %51 = arith.subf %50, %49 : vector<128x1xf32>
    %52 = arith.mulf %48, %51 : vector<128x1xf32>
    %53 = vector.broadcast %52 : vector<128x1xf32> to vector<128x128xf32>
    %54 = arith.mulf %45, %53 : vector<128x128xf32>
    %cst_25 = arith.constant dense<0.000000e+00> : vector<128x8xf32>
    %55 = tpu.matmul %54, %37, %cst_25 {dimension_numbers = #tpu.dot_dimension_numbers<[1], [0], [0], [1], [0, 0, 1, 1], [], []>} : vector<128x128xf32>, vector<128x8xf32>, vector<128x8xf32> -> vector<128x8xf32>
    %56 = vector.extract_strided_slice %55 {offsets = [0, 0], sizes = [32, 8], strides = [1, 1]} : vector<128x8xf32> to vector<32x8xf32>
    %57 = vector.extract_strided_slice %55 {offsets = [32, 0], sizes = [32, 8], strides = [1, 1]} : vector<128x8xf32> to vector<32x8xf32>
    %58 = vector.extract_strided_slice %55 {offsets = [64, 0], sizes = [32, 8], strides = [1, 1]} : vector<128x8xf32> to vector<32x8xf32>
    %59 = vector.extract_strided_slice %55 {offsets = [96, 0], sizes = [32, 8], strides = [1, 1]} : vector<128x8xf32> to vector<32x8xf32>
    %60 = tpu.concatenate %56, %57, %58, %59 in 1 : vector<32x8xf32>, vector<32x8xf32>, vector<32x8xf32>, vector<32x8xf32> -> vector<32x32xf32>
    %c0_26 = arith.constant 0 : index
    %c0_27 = arith.constant 0 : index
    %61 = vector.load %arg6[%c0_26, %c0_27] : memref<32x64xf32, #tpu.memory_space<vmem>>, vector<32x64xf32>
    %cst_28 = arith.constant dense<0.000000e+00> : vector<32x64xf32>
    %62 = tpu.matmul %60, %61, %cst_28 {dimension_numbers = #tpu.dot_dimension_numbers<[1], [0], [0], [1], [0, 0, 1, 1], [], []>} : vector<32x32xf32>, vector<32x64xf32>, vector<32x64xf32> -> vector<32x64xf32>
    %c0_29 = arith.constant 0 : index
    %c0_30 = arith.constant 0 : index
    %63 = vector.load %arg10[%c0_29, %c0_30] : memref<32x64xf32, #tpu.memory_space<vmem>>, vector<32x64xf32>
    tpu.vector_store %arg10[%c0_29, %c0_30], %62 {strides = array<i32>} : memref<32x64xf32, #tpu.memory_space<vmem>>, vector<32x64xf32>,
    return
  }
}

</mosaic_0001>

<llo_original>
// kernel: llama_attention_pallas.1
$region0: #{llama_attention_pallas.1}
  #allocation0 [shape = 'u32[]', space=smem, size = 0x4, offset = 0x4, fixed_abs, tag = 'smem constant byte address 0x4 - core index']
  #allocation1 [shape = 'u32[144,128]{1,0:T(1,128)}', space=vmem, size = 0x12000, scoped, tag = 'internal scratch']
  %s0 = inlined_call_operand.vmem [shape: f32[32,64], index: 0, kind: input, shape index: {}]
  %s1 = inlined_call_operand.vmem [shape: f32[64,32], index: 1, kind: input, shape index: {}]
  %s2 = inlined_call_operand.vmem [shape: f32[64,32], index: 2, kind: input, shape index: {}]
  %s3 = inlined_call_operand.vmem [shape: f32[32,128], index: 3, kind: input, shape index: {}]
  %s4 = inlined_call_operand.vmem [shape: f32[32,128], index: 4, kind: input, shape index: {}]
  %s5 = inlined_call_operand.vmem [shape: f32[64,32], index: 5, kind: input, shape index: {}]
  %s6 = inlined_call_operand.hbm [shape: f32[32,64], index: 6, kind: input, shape index: {}]
  %s7 = inlined_call_operand.hbm [shape: f32[32,64], index: 7, kind: input, shape index: {}]
  %s8 = inlined_call_operand.vmem [shape: f32[32,64], index: 8, kind: input, shape index: {}]
  %s9 = inlined_call_operand.vmem [shape: f32[128,128], index: 9, kind: input, shape index: {}]
  %s10 = inlined_call_operand.hbm [shape: f32[32,64], index: 10, kind: output, shape index: {}]
  %s11 = sld [smem:[#allocation0]]
  $region58: #{llama_attention_pallas.1} parent=0
    _
  %s13 = ssub.s32 1, %s11
  %s14 = scalar_select 0, %s13, %s11
  $region1: #{llama_attention_pallas.1} parent=0
    #allocation2 [shape = 'u8[16384]{0}', space=vmem, size = 0x4000, scoped, tag = 'input window, operand 6, single buffered']
    #allocation3 [shape = 's32[1]{0}', space=sflag, size = 0x4, scoped, tag = 'scoped memory for llama_attention_pallas.1']
    #allocation4 [shape = 's32[1]{0}', space=sflag, size = 0x4, scoped, tag = 'scoped memory for llama_attention_pallas.1']
    #allocation5 [shape = 'u8[16384]{0}', space=vmem, size = 0x4000, scoped, tag = 'input window, operand 7, single buffered']
    #allocation6 [shape = 's32[1]{0}', space=sflag, size = 0x4, scoped, tag = 'scoped memory for llama_attention_pallas.1']
    #allocation7 [shape = 'u8[16384]{0}', space=vmem, size = 0x4000, scoped, tag = 'output window, operand 0, single buffered']
    %15 = vsyncpa [#allocation3], 0
    %16 = vsyncpa [#allocation6], 0
    %17 = vsyncpa [#allocation4], 0
    // Predicated region
    $region2: #{llama_attention_pallas.1} parent=1 // pred_check
      _
    $region3: #{llama_attention_pallas.1} parent=1 // pred_check_branch
      %19 = sbr.rel (0) target = $region5
    $region4: #{llama_attention_pallas.1} parent=1 // pred_region
      _
    $region5: #{llama_attention_pallas.1} parent=1 // pred_fallthru
      _
    // Predicated region
    $region6: #{llama_attention_pallas.1} parent=1 // pred_check
      _
    $region7: #{llama_attention_pallas.1} parent=1 // pred_check_branch
      %21 = sbr.rel (0) target = $region9
    $region8: #{llama_attention_pallas.1} parent=1 // pred_region
      _
    $region9: #{llama_attention_pallas.1} parent=1 // pred_fallthru
      _
    // Predicated region
    $region10: #{llama_attention_pallas.1} parent=1 // pred_check
      _
    $region11: #{llama_attention_pallas.1} parent=1 // pred_check_branch
      %23 = sbr.rel (0) target = $region13
    $region12: #{llama_attention_pallas.1} parent=1 // pred_region
      _
    $region13: #{llama_attention_pallas.1} parent=1 // pred_fallthru
      _
    // Predicated region
    $region14: #{llama_attention_pallas.1} parent=1 // pred_check
      _
    $region15: #{llama_attention_pallas.1} parent=1 // pred_check_branch
      %25 = sbr.rel (0) target = $region17
    $region16: #{llama_attention_pallas.1} parent=1 // pred_region
      _
    $region17: #{llama_attention_pallas.1} parent=1 // pred_fallthru
      _
    // Predicated region
    $region18: #{llama_attention_pallas.1} parent=1 // pred_check
      _
    $region19: #{llama_attention_pallas.1} parent=1 // pred_check_branch
      %27 = sbr.rel (0) target = $region21
    $region20: #{llama_attention_pallas.1} parent=1 // pred_region
      _
    $region21: #{llama_attention_pallas.1} parent=1 // pred_fallthru
      _
    // Predicated region
    $region22: #{llama_attention_pallas.1} parent=1 // pred_check
      _
    $region23: #{llama_attention_pallas.1} parent=1 // pred_check_branch
      %29 = sbr.rel (0) target = $region25
    $region24: #{llama_attention_pallas.1} parent=1 // pred_region
      _
    $region25: #{llama_attention_pallas.1} parent=1 // pred_fallthru
      _
    // Predicated region
    $region26: #{llama_attention_pallas.1} parent=1 // pred_check
      _
    $region27: #{llama_attention_pallas.1} parent=1 // pred_check_branch
      %31 = sbr.rel (0) target = $region29
    $region28: #{llama_attention_pallas.1} parent=1 // pred_region
      %s33 = ssub.s32 512, 512
      %34 = vsyncadd [#allocation3], %s33
      %s35 = sshll.u32 [#allocation2], 4
      %s36 = int_to_ptr.vmem [resolvable:$true] %s35
      %41 = dma.hbm_to_vmem [thread:$0]  %s6, 512, %s36, [#allocation3], 128, 128, 8
    $region29: #{llama_attention_pallas.1} parent=1 // pred_fallthru
      _
    // Predicated region
    $region30: #{llama_attention_pallas.1} parent=1 // pred_check
      _
    $region31: #{llama_attention_pallas.1} parent=1 // pred_check_branch
      %43 = sbr.rel (0) target = $region33
    $region32: #{llama_attention_pallas.1} parent=1 // pred_region
      %s45 = ssub.s32 512, 512
      %46 = vsyncadd [#allocation6], %s45
      %s47 = sshll.u32 [#allocation5], 4
      %s48 = int_to_ptr.vmem [resolvable:$true] %s47
      %53 = dma.hbm_to_vmem [thread:$0]  %s7, 512, %s48, [#allocation6], 128, 128, 8
    $region33: #{llama_attention_pallas.1} parent=1 // pred_fallthru
      _
    // Predicated region
    $region34: #{llama_attention_pallas.1} parent=1 // pred_check
      _
    $region35: #{llama_attention_pallas.1} parent=1 // pred_check_branch
      %55 = sbr.rel (0) target = $region37
    $region36: #{llama_attention_pallas.1} parent=1 // pred_region
      _
    $region37: #{llama_attention_pallas.1} parent=1 // pred_fallthru
      _
    // Predicated region
    $region38: #{llama_attention_pallas.1} parent=1 // pred_check
      _
    $region39: #{llama_attention_pallas.1} parent=1 // pred_check_branch
      %57 = sbr.rel (0) target = $region41
    $region40: #{llama_attention_pallas.1} parent=1 // pred_region
      _
    $region41: #{llama_attention_pallas.1} parent=1 // pred_fallthru
      _
    // Predicated region
    $region42: #{llama_attention_pallas.1} parent=1 // pred_check
      _
    $region43: #{llama_attention_pallas.1} parent=1 // pred_check_branch
      %59 = sbr.rel (0) target = $region45
    $region44: #{llama_attention_pallas.1} parent=1 // pred_region
      %60 = dma.done [#allocation3], 512
    $region45: #{llama_attention_pallas.1} parent=1 // pred_fallthru
      _
    // Predicated region
    $region46: #{llama_attention_pallas.1} parent=1 // pred_check
      _
    $region47: #{llama_attention_pallas.1} parent=1 // pred_check_branch
      %62 = sbr.rel (0) target = $region49
    $region48: #{llama_attention_pallas.1} parent=1 // pred_region
      %63 = dma.done [#allocation6], 512
    $region49: #{llama_attention_pallas.1} parent=1 // pred_fallthru
      _
    %v64 = vld [vmem:[%s0] sm:$0xff]
    %v65 = vld [vmem:[%s0 + $0x8] sm:$0xff]
    %v66 = vld [vmem:[%s0 + $0x10] sm:$0xff]
    %v67 = vld [vmem:[%s0 + $0x18] sm:$0xff]
    %v68 = vld [vmem:[#allocation5] sm:$0xff]
    %v69 = vld [vmem:[#allocation5 + $0x8] sm:$0xff]
    %v70 = vld [vmem:[#allocation5 + $0x10] sm:$0xff]
    %v71 = vld [vmem:[#allocation5 + $0x18] sm:$0xff]
    %v72 = vld [vmem:[%s8] sm:$0xff]
    %v73 = vld [vmem:[%s8 + $0x8] sm:$0xff]
    %v74 = vld [vmem:[%s8 + $0x10] sm:$0xff]
    %v75 = vld [vmem:[%s8 + $0x18] sm:$0xff]
    %v76 = vld [vmem:[%s1] sm:$0xff]
    %v77 = vld [vmem:[%s1 + $0x8] sm:$0xff]
    %v78 = vld [vmem:[%s1 + $0x10] sm:$0xff]
    %v79 = vld [vmem:[%s1 + $0x18] sm:$0xff]
    %v80 = vld [vmem:[%s1 + $0x20] sm:$0xff]
    %v81 = vld [vmem:[%s1 + $0x28] sm:$0xff]
    %v82 = vld [vmem:[%s1 + $0x30] sm:$0xff]
    %v83 = vld [vmem:[%s1 + $0x38] sm:$0xff]
    %vm84 = vcmask 523264
    %v86 = vsel %vm84, %v64, 0
    %v89 = vsel %vm84, %v65, 0
    %v92 = vsel %vm84, %v66, 0
    %v95 = vsel %vm84, %v67, 0
    %97 = vmatprep.subr.mxu0 0.0
    %98 = vmatpush1.msra.mxu0 %v76
    %99 = vmatprep.subr.mxu0 0.0
    %100 = vmatpush1.msra.mxu0 %v77
    %101 = vmatprep.subr.mxu0 0.0
    %102 = vmatpush1.msra.mxu0 %v78
    %103 = vmatprep.subr.mxu0 0.0
    %104 = vmatpush1.msra.mxu0 %v79
    %105 = vmatprep.subr.mxu0 0.0
    %106 = vmatpush1.msra.mxu0 %v80
    %107 = vmatprep.subr.mxu0 0.0
    %108 = vmatpush1.msra.mxu0 %v81
    %109 = vmatprep.subr.mxu0 0.0
    %110 = vmatpush1.msra.mxu0 %v82
    %111 = vmatprep.subr.mxu0 0.0
    %112 = vmatpush1.msra.mxu0 %v83
    %113 = vmatprep.subr.mxu0 0.0
    %114 = vmatpush1.msra.mxu0 0.0
    %115 = vmatprep.subr.mxu0 0.0
    %116 = vmatpush1.msra.mxu0 0.0
    %117 = vmatprep.subr.mxu0 0.0
    %118 = vmatpush1.msra.mxu0 0.0
    %119 = vmatprep.subr.mxu0 0.0
    %120 = vmatpush1.msra.mxu0 0.0
    %121 = vmatprep.subr.mxu0 0.0
    %122 = vmatpush1.msra.mxu0 0.0
    %123 = vmatprep.subr.mxu0 0.0
    %124 = vmatpush1.msra.mxu0 0.0
    %125 = vmatprep.subr.mxu0 0.0
    %126 = vmatpush1.msra.mxu0 0.0
    %127 = vmatprep.subr.mxu0 0.0
    %128 = vmatpush1.msra.mxu0 0.0
    %129 = vmatprep.subr.mxu0 0.0
    %130 = vmatpush1.msra.mxu0 0.0
    %131 = vmatprep.subr.mxu0 0.0
    %132 = vmatpush1.msra.mxu0 0.0
    %133 = vmatprep.subr.mxu0 0.0
    %134 = vmatpush1.msra.mxu0 0.0
    %135 = vmatprep.subr.mxu0 0.0
    %136 = vmatpush1.msra.mxu0 0.0
    %137 = vmatprep.subr.mxu0 0.0
    %138 = vmatpush1.msra.mxu0 0.0
    %139 = vmatprep.subr.mxu0 0.0
    %140 = vmatpush1.msra.mxu0 0.0
    %141 = vmatprep.subr.mxu0 0.0
    %142 = vmatpush1.msra.mxu0 0.0
    %143 = vmatprep.subr.mxu0 0.0
    %144 = vmatpush1.msra.mxu0 0.0
    %145 = vmatprep.subr.mxu0 0.0
    %146 = vmatpush1.msra.mxu0 0.0
    %147 = vmatprep.subr.mxu0 0.0
    %148 = vmatpush1.msra.mxu0 0.0
    %149 = vmatprep.subr.mxu0 0.0
    %150 = vmatpush1.msra.mxu0 0.0
    %151 = vmatprep.subr.mxu0 0.0
    %152 = vmatpush1.msra.mxu0 0.0
    %153 = vmatprep.subr.mxu0 0.0
    %154 = vmatpush1.msra.mxu0 0.0
    %155 = vmatprep.subr.mxu0 0.0
    %156 = vmatpush1.msra.mxu0 0.0
    %157 = vmatprep.subr.mxu0 0.0
    %158 = vmatpush1.msra.mxu0 0.0
    %159 = vmatprep.subr.mxu0 0.0
    %160 = vmatpush1.msra.mxu0 0.0
    %161 = vmatprep.mubr.f32.mxu0 0.0
    %162 = vmatmul.mubr.f32.gmra.mrb[0].mxu0 %v86
    %v163 = vpop.f32.mrb[0].mxu0
    %v164 = vadd.f32 0.0, %v163
    %v165 = vpop.f32.mrb[0].mxu0
    %166 = vmatprep.mubr.f32.mxu0 0.0
    %167 = vmatmul.mubr.f32.gmra.mrb[0].mxu0 %v89
    %v168 = vpop.f32.mrb[0].mxu0
    %v169 = vadd.f32 0.0, %v168
    %v170 = vpop.f32.mrb[0].mxu0
    %171 = vmatprep.mubr.f32.mxu0 0.0
    %172 = vmatmul.mubr.f32.gmra.mrb[0].mxu0 %v92
    %v173 = vpop.f32.mrb[0].mxu0
    %v174 = vadd.f32 0.0, %v173
    %v175 = vpop.f32.mrb[0].mxu0
    %176 = vmatprep.mubr.f32.mxu0 0.0
    %177 = vmatmul.mubr.f32.gmra.mrb[0].mxu0 %v95
    %v178 = vpop.f32.mrb[0].mxu0
    %v179 = vadd.f32 0.0, %v178
    %v180 = vpop.f32.mrb[0].mxu0
    %181 = vdwg.mxu0
    %v182 = vld [vmem:[%s2] sm:$0xff]
    %v183 = vld [vmem:[%s2 + $0x8] sm:$0xff]
    %v184 = vld [vmem:[%s2 + $0x10] sm:$0xff]
    %v185 = vld [vmem:[%s2 + $0x18] sm:$0xff]
    %v186 = vld [vmem:[%s2 + $0x20] sm:$0xff]
    %v187 = vld [vmem:[%s2 + $0x28] sm:$0xff]
    %v188 = vld [vmem:[%s2 + $0x30] sm:$0xff]
    %v189 = vld [vmem:[%s2 + $0x38] sm:$0xff]
    %190 = vmatprep.subr.mxu0 0.0
    %191 = vmatpush1.msra.mxu0 %v182
    %192 = vmatprep.subr.mxu0 0.0
    %193 = vmatpush1.msra.mxu0 %v183
    %194 = vmatprep.subr.mxu0 0.0
    %195 = vmatpush1.msra.mxu0 %v184
    %196 = vmatprep.subr.mxu0 0.0
    %197 = vmatpush1.msra.mxu0 %v185
    %198 = vmatprep.subr.mxu0 0.0
    %199 = vmatpush1.msra.mxu0 %v186
    %200 = vmatprep.subr.mxu0 0.0
    %201 = vmatpush1.msra.mxu0 %v187
    %202 = vmatprep.subr.mxu0 0.0
    %203 = vmatpush1.msra.mxu0 %v188
    %204 = vmatprep.subr.mxu0 0.0
    %205 = vmatpush1.msra.mxu0 %v189
    %206 = vmatprep.subr.mxu0 0.0
    %207 = vmatpush1.msra.mxu0 0.0
    %208 = vmatprep.subr.mxu0 0.0
    %209 = vmatpush1.msra.mxu0 0.0
    %210 = vmatprep.subr.mxu0 0.0
    %211 = vmatpush1.msra.mxu0 0.0
    %212 = vmatprep.subr.mxu0 0.0
    %213 = vmatpush1.msra.mxu0 0.0
    %214 = vmatprep.subr.mxu0 0.0
    %215 = vmatpush1.msra.mxu0 0.0
    %216 = vmatprep.subr.mxu0 0.0
    %217 = vmatpush1.msra.mxu0 0.0
    %218 = vmatprep.subr.mxu0 0.0
    %219 = vmatpush1.msra.mxu0 0.0
    %220 = vmatprep.subr.mxu0 0.0
    %221 = vmatpush1.msra.mxu0 0.0
    %222 = vmatprep.subr.mxu0 0.0
    %223 = vmatpush1.msra.mxu0 0.0
    %224 = vmatprep.subr.mxu0 0.0
    %225 = vmatpush1.msra.mxu0 0.0
    %226 = vmatprep.subr.mxu0 0.0
    %227 = vmatpush1.msra.mxu0 0.0
    %228 = vmatprep.subr.mxu0 0.0
    %229 = vmatpush1.msra.mxu0 0.0
    %230 = vmatprep.subr.mxu0 0.0
    %231 = vmatpush1.msra.mxu0 0.0
    %232 = vmatprep.subr.mxu0 0.0
    %233 = vmatpush1.msra.mxu0 0.0
    %234 = vmatprep.subr.mxu0 0.0
    %235 = vmatpush1.msra.mxu0 0.0
    %236 = vmatprep.subr.mxu0 0.0
    %237 = vmatpush1.msra.mxu0 0.0
    %238 = vmatprep.subr.mxu0 0.0
    %239 = vmatpush1.msra.mxu0 0.0
    %240 = vmatprep.subr.mxu0 0.0
    %241 = vmatpush1.msra.mxu0 0.0
    %242 = vmatprep.subr.mxu0 0.0
    %243 = vmatpush1.msra.mxu0 0.0
    %244 = vmatprep.subr.mxu0 0.0
    %245 = vmatpush1.msra.mxu0 0.0
    %246 = vmatprep.subr.mxu0 0.0
    %247 = vmatpush1.msra.mxu0 0.0
    %248 = vmatprep.subr.mxu0 0.0
    %249 = vmatpush1.msra.mxu0 0.0
    %250 = vmatprep.subr.mxu0 0.0
    %251 = vmatpush1.msra.mxu0 0.0
    %252 = vmatprep.subr.mxu0 0.0
    %253 = vmatpush1.msra.mxu0 0.0
    %254 = vmatprep.mubr.f32.mxu0 0.0
    %255 = vmatmul.mubr.f32.gmra.mrb[0].mxu0 %v86
    %v256 = vpop.f32.mrb[0].mxu0
    %v257 = vadd.f32 0.0, %v256
    %v258 = vpop.f32.mrb[0].mxu0
    %259 = vmatprep.mubr.f32.mxu0 0.0
    %260 = vmatmul.mubr.f32.gmra.mrb[0].mxu0 %v89
    %v261 = vpop.f32.mrb[0].mxu0
    %v262 = vadd.f32 0.0, %v261
    %v263 = vpop.f32.mrb[0].mxu0
    %264 = vmatprep.mubr.f32.mxu0 0.0
    %265 = vmatmul.mubr.f32.gmra.mrb[0].mxu0 %v92
    %v266 = vpop.f32.mrb[0].mxu0
    %v267 = vadd.f32 0.0, %v266
    %v268 = vpop.f32.mrb[0].mxu0
    %269 = vmatprep.mubr.f32.mxu0 0.0
    %270 = vmatmul.mubr.f32.gmra.mrb[0].mxu0 %v95
    %v271 = vpop.f32.mrb[0].mxu0
    %v272 = vadd.f32 0.0, %v271
    %v273 = vpop.f32.mrb[0].mxu0
    %274 = vdwg.mxu0
    %v275 = vld [vmem:[%s3] sm:$0xff]
    %v276 = vld [vmem:[%s3 + $0x8] sm:$0xff]
    %v277 = vld [vmem:[%s3 + $0x10] sm:$0xff]
    %v278 = vld [vmem:[%s3 + $0x18] sm:$0xff]
    %vm279 = vcmask 261120
    %v281 = vsel %vm279, %v164, 0
    %v284 = vsel %vm279, %v169, 0
    %v287 = vsel %vm279, %v174, 0
    %v290 = vsel %vm279, %v179, 0
    %292 = vmatprep.subr.mxu0 0.0
    %293 = vmatpush1.msra.mxu0 %v275
    %294 = vmatprep.subr.mxu0 0.0
    %295 = vmatpush1.msra.mxu0 %v276
    %296 = vmatprep.subr.mxu0 0.0
    %297 = vmatpush1.msra.mxu0 %v277
    %298 = vmatprep.subr.mxu0 0.0
    %299 = vmatpush1.msra.mxu0 %v278
    %300 = vmatprep.subr.mxu0 0.0
    %301 = vmatpush1.msra.mxu0 0.0
    %302 = vmatprep.subr.mxu0 0.0
    %303 = vmatpush1.msra.mxu0 0.0
    %304 = vmatprep.subr.mxu0 0.0
    %305 = vmatpush1.msra.mxu0 0.0
    %306 = vmatprep.subr.mxu0 0.0
    %307 = vmatpush1.msra.mxu0 0.0
    %308 = vmatprep.subr.mxu0 0.0
    %309 = vmatpush1.msra.mxu0 0.0
    %310 = vmatprep.subr.mxu0 0.0
    %311 = vmatpush1.msra.mxu0 0.0
    %312 = vmatprep.subr.mxu0 0.0
    %313 = vmatpush1.msra.mxu0 0.0
    %314 = vmatprep.subr.mxu0 0.0
    %315 = vmatpush1.msra.mxu0 0.0
    %316 = vmatprep.subr.mxu0 0.0
    %317 = vmatpush1.msra.mxu0 0.0
    %318 = vmatprep.subr.mxu0 0.0
    %319 = vmatpush1.msra.mxu0 0.0
    %320 = vmatprep.subr.mxu0 0.0
    %321 = vmatpush1.msra.mxu0 0.0
    %322 = vmatprep.subr.mxu0 0.0
    %323 = vmatpush1.msra.mxu0 0.0
    %324 = vmatprep.subr.mxu0 0.0
    %325 = vmatpush1.msra.mxu0 0.0
    %326 = vmatprep.subr.mxu0 0.0
    %327 = vmatpush1.msra.mxu0 0.0
    %328 = vmatprep.subr.mxu0 0.0
    %329 = vmatpush1.msra.mxu0 0.0
    %330 = vmatprep.subr.mxu0 0.0
    %331 = vmatpush1.msra.mxu0 0.0
    %332 = vmatprep.subr.mxu0 0.0
    %333 = vmatpush1.msra.mxu0 0.0
    %334 = vmatprep.subr.mxu0 0.0
    %335 = vmatpush1.msra.mxu0 0.0
    %336 = vmatprep.subr.mxu0 0.0
    %337 = vmatpush1.msra.mxu0 0.0
    %338 = vmatprep.subr.mxu0 0.0
    %339 = vmatpush1.msra.mxu0 0.0
    %340 = vmatprep.subr.mxu0 0.0
    %341 = vmatpush1.msra.mxu0 0.0
    %342 = vmatprep.subr.mxu0 0.0
    %343 = vmatpush1.msra.mxu0 0.0
    %344 = vmatprep.subr.mxu0 0.0
    %345 = vmatpush1.msra.mxu0 0.0
    %346 = vmatprep.subr.mxu0 0.0
    %347 = vmatpush1.msra.mxu0 0.0
    %348 = vmatprep.subr.mxu0 0.0
    %349 = vmatpush1.msra.mxu0 0.0
    %350 = vmatprep.subr.mxu0 0.0
    %351 = vmatpush1.msra.mxu0 0.0
    %352 = vmatprep.subr.mxu0 0.0
    %353 = vmatpush1.msra.mxu0 0.0
    %354 = vmatprep.subr.mxu0 0.0
    %355 = vmatpush1.msra.mxu0 0.0
    %356 = vmatprep.mubr.f32.mxu0 0.0
    %357 = vmatmul.mubr.f32.gmra.mrb[0].mxu0 %v281
    %v358 = vpop.f32.mrb[0].mxu0
    %v359 = vadd.f32 0.0, %v358
    %v360 = vpop.f32.mrb[0].mxu0
    %361 = vmatprep.mubr.f32.mxu0 0.0
    %362 = vmatmul.mubr.f32.gmra.mrb[0].mxu0 %v284
    %v363 = vpop.f32.mrb[0].mxu0
    %v364 = vadd.f32 0.0, %v363
    %v365 = vpop.f32.mrb[0].mxu0
    %366 = vmatprep.mubr.f32.mxu0 0.0
    %367 = vmatmul.mubr.f32.gmra.mrb[0].mxu0 %v287
    %v368 = vpop.f32.mrb[0].mxu0
    %v369 = vadd.f32 0.0, %v368
    %v370 = vpop.f32.mrb[0].mxu0
    %371 = vmatprep.mubr.f32.mxu0 0.0
    %372 = vmatmul.mubr.f32.gmra.mrb[0].mxu0 %v290
    %v373 = vpop.f32.mrb[0].mxu0
    %v374 = vadd.f32 0.0, %v373
    %v375 = vpop.f32.mrb[0].mxu0
    %376 = vdwg.mxu0
    %v377 = vld [vmem:[%s4] sm:$0xff]
    %v378 = vld [vmem:[%s4 + $0x8] sm:$0xff]
    %v379 = vld [vmem:[%s4 + $0x10] sm:$0xff]
    %v380 = vld [vmem:[%s4 + $0x18] sm:$0xff]
    %v382 = vsel %vm279, %v257, 0
    %v385 = vsel %vm279, %v262, 0
    %v388 = vsel %vm279, %v267, 0
    %v391 = vsel %vm279, %v272, 0
    %393 = vmatprep.subr.mxu0 0.0
    %394 = vmatpush1.msra.mxu0 %v377
    %395 = vmatprep.subr.mxu0 0.0
    %396 = vmatpush1.msra.mxu0 %v378
    %397 = vmatprep.subr.mxu0 0.0
    %398 = vmatpush1.msra.mxu0 %v379
    %399 = vmatprep.subr.mxu0 0.0
    %400 = vmatpush1.msra.mxu0 %v380
    %401 = vmatprep.subr.mxu0 0.0
    %402 = vmatpush1.msra.mxu0 0.0
    %403 = vmatprep.subr.mxu0 0.0
    %404 = vmatpush1.msra.mxu0 0.0
    %405 = vmatprep.subr.mxu0 0.0
    %406 = vmatpush1.msra.mxu0 0.0
    %407 = vmatprep.subr.mxu0 0.0
    %408 = vmatpush1.msra.mxu0 0.0
    %409 = vmatprep.subr.mxu0 0.0
    %410 = vmatpush1.msra.mxu0 0.0
    %411 = vmatprep.subr.mxu0 0.0
    %412 = vmatpush1.msra.mxu0 0.0
    %413 = vmatprep.subr.mxu0 0.0
    %414 = vmatpush1.msra.mxu0 0.0
    %415 = vmatprep.subr.mxu0 0.0
    %416 = vmatpush1.msra.mxu0 0.0
    %417 = vmatprep.subr.mxu0 0.0
    %418 = vmatpush1.msra.mxu0 0.0
    %419 = vmatprep.subr.mxu0 0.0
    %420 = vmatpush1.msra.mxu0 0.0
    %421 = vmatprep.subr.mxu0 0.0
    %422 = vmatpush1.msra.mxu0 0.0
    %423 = vmatprep.subr.mxu0 0.0
    %424 = vmatpush1.msra.mxu0 0.0
    %425 = vmatprep.subr.mxu0 0.0
    %426 = vmatpush1.msra.mxu0 0.0
    %427 = vmatprep.subr.mxu0 0.0
    %428 = vmatpush1.msra.mxu0 0.0
    %429 = vmatprep.subr.mxu0 0.0
    %430 = vmatpush1.msra.mxu0 0.0
    %431 = vmatprep.subr.mxu0 0.0
    %432 = vmatpush1.msra.mxu0 0.0
    %433 = vmatprep.subr.mxu0 0.0
    %434 = vmatpush1.msra.mxu0 0.0
    %435 = vmatprep.subr.mxu0 0.0
    %436 = vmatpush1.msra.mxu0 0.0
    %437 = vmatprep.subr.mxu0 0.0
    %438 = vmatpush1.msra.mxu0 0.0
    %439 = vmatprep.subr.mxu0 0.0
    %440 = vmatpush1.msra.mxu0 0.0
    %441 = vmatprep.subr.mxu0 0.0
    %442 = vmatpush1.msra.mxu0 0.0
    %443 = vmatprep.subr.mxu0 0.0
    %444 = vmatpush1.msra.mxu0 0.0
    %445 = vmatprep.subr.mxu0 0.0
    %446 = vmatpush1.msra.mxu0 0.0
    %447 = vmatprep.subr.mxu0 0.0
    %448 = vmatpush1.msra.mxu0 0.0
    %449 = vmatprep.subr.mxu0 0.0
    %450 = vmatpush1.msra.mxu0 0.0
    %451 = vmatprep.subr.mxu0 0.0
    %452 = vmatpush1.msra.mxu0 0.0
    %453 = vmatprep.subr.mxu0 0.0
    %454 = vmatpush1.msra.mxu0 0.0
    %455 = vmatprep.subr.mxu0 0.0
    %456 = vmatpush1.msra.mxu0 0.0
    %457 = vmatprep.mubr.f32.mxu0 0.0
    %458 = vmatmul.mubr.f32.gmra.mrb[0].mxu0 %v382
    %v459 = vpop.f32.mrb[0].mxu0
    %v460 = vadd.f32 0.0, %v459
    %v461 = vpop.f32.mrb[0].mxu0
    %462 = vmatprep.mubr.f32.mxu0 0.0
    %463 = vmatmul.mubr.f32.gmra.mrb[0].mxu0 %v385
    %v464 = vpop.f32.mrb[0].mxu0
    %v465 = vadd.f32 0.0, %v464
    %v466 = vpop.f32.mrb[0].mxu0
    %467 = vmatprep.mubr.f32.mxu0 0.0
    %468 = vmatmul.mubr.f32.gmra.mrb[0].mxu0 %v388
    %v469 = vpop.f32.mrb[0].mxu0
    %v470 = vadd.f32 0.0, %v469
    %v471 = vpop.f32.mrb[0].mxu0
    %472 = vmatprep.mubr.f32.mxu0 0.0
    %473 = vmatmul.mubr.f32.gmra.mrb[0].mxu0 %v391
    %v474 = vpop.f32.mrb[0].mxu0
    %v475 = vadd.f32 0.0, %v474
    %v476 = vpop.f32.mrb[0].mxu0
    %477 = vdwg.mxu0
    %v478 = vmul.f32 %v359, %v68
    %v479 = vmul.f32 %v364, %v69
    %v480 = vmul.f32 %v369, %v70
    %v481 = vmul.f32 %v374, %v71
    %486 = vrot.lane.b32.xlu0 %v72, 64
    %v487 = vpop.permute.xlu0 %486
    %488 = vrot.lane.b32.xlu0 %v73, 64
    %v489 = vpop.permute.xlu0 %488
    %490 = vrot.lane.b32.xlu0 %v74, 64
    %v491 = vpop.permute.xlu0 %490
    %492 = vrot.lane.b32.xlu0 %v75, 64
    %v493 = vpop.permute.xlu0 %492
    %v498 = vmul.f32 %v359, %v487
    %v499 = vmul.f32 %v364, %v489
    %v500 = vmul.f32 %v369, %v491
    %v501 = vmul.f32 %v374, %v493
    %506 = vrot.lane.b32.xlu0 %v498, 64
    %v507 = vpop.permute.xlu0 %506
    %508 = vrot.lane.b32.xlu0 %v499, 64
    %v509 = vpop.permute.xlu0 %508
    %510 = vrot.lane.b32.xlu0 %v500, 64
    %v511 = vpop.permute.xlu0 %510
    %512 = vrot.lane.b32.xlu0 %v501, 64
    %v513 = vpop.permute.xlu0 %512
    %v518 = vadd.f32 %v478, %v507
    %v519 = vadd.f32 %v479, %v509
    %v520 = vadd.f32 %v480, %v511
    %v521 = vadd.f32 %v481, %v513
    %v522 = vmul.f32 %v460, %v68
    %v523 = vmul.f32 %v465, %v69
    %v524 = vmul.f32 %v470, %v70
    %v525 = vmul.f32 %v475, %v71
    %v526 = vmul.f32 %v460, %v487
    %v527 = vmul.f32 %v465, %v489
    %v528 = vmul.f32 %v470, %v491
    %v529 = vmul.f32 %v475, %v493
    %534 = vrot.lane.b32.xlu0 %v526, 64
    %v535 = vpop.permute.xlu0 %534
    %536 = vrot.lane.b32.xlu0 %v527, 64
    %v537 = vpop.permute.xlu0 %536
    %538 = vrot.lane.b32.xlu0 %v528, 64
    %v539 = vpop.permute.xlu0 %538
    %540 = vrot.lane.b32.xlu0 %v529, 64
    %v541 = vpop.permute.xlu0 %540
    %v546 = vadd.f32 %v522, %v535
    %v547 = vadd.f32 %v523, %v537
    %v548 = vadd.f32 %v524, %v539
    %v549 = vadd.f32 %v525, %v541
    %v550 = vld [vmem:[%s5] sm:$0xff]
    %v551 = vld [vmem:[%s5 + $0x8] sm:$0xff]
    %v552 = vld [vmem:[%s5 + $0x10] sm:$0xff]
    %v553 = vld [vmem:[%s5 + $0x18] sm:$0xff]
    %v554 = vld [vmem:[%s5 + $0x20] sm:$0xff]
    %v555 = vld [vmem:[%s5 + $0x28] sm:$0xff]
    %v556 = vld [vmem:[%s5 + $0x30] sm:$0xff]
    %v557 = vld [vmem:[%s5 + $0x38] sm:$0xff]
    %558 = vmatprep.subr.mxu0 0.0
    %559 = vmatpush1.msra.mxu0 %v550
    %560 = vmatprep.subr.mxu0 0.0
    %561 = vmatpush1.msra.mxu0 %v551
    %562 = vmatprep.subr.mxu0 0.0
    %563 = vmatpush1.msra.mxu0 %v552
    %564 = vmatprep.subr.mxu0 0.0
    %565 = vmatpush1.msra.mxu0 %v553
    %566 = vmatprep.subr.mxu0 0.0
    %567 = vmatpush1.msra.mxu0 %v554
    %568 = vmatprep.subr.mxu0 0.0
    %569 = vmatpush1.msra.mxu0 %v555
    %570 = vmatprep.subr.mxu0 0.0
    %571 = vmatpush1.msra.mxu0 %v556
    %572 = vmatprep.subr.mxu0 0.0
    %573 = vmatpush1.msra.mxu0 %v557
    %574 = vmatprep.subr.mxu0 0.0
    %575 = vmatpush1.msra.mxu0 0.0
    %576 = vmatprep.subr.mxu0 0.0
    %577 = vmatpush1.msra.mxu0 0.0
    %578 = vmatprep.subr.mxu0 0.0
    %579 = vmatpush1.msra.mxu0 0.0
    %580 = vmatprep.subr.mxu0 0.0
    %581 = vmatpush1.msra.mxu0 0.0
    %582 = vmatprep.subr.mxu0 0.0
    %583 = vmatpush1.msra.mxu0 0.0
    %584 = vmatprep.subr.mxu0 0.0
    %585 = vmatpush1.msra.mxu0 0.0
    %586 = vmatprep.subr.mxu0 0.0
    %587 = vmatpush1.msra.mxu0 0.0
    %588 = vmatprep.subr.mxu0 0.0
    %589 = vmatpush1.msra.mxu0 0.0
    %590 = vmatprep.subr.mxu0 0.0
    %591 = vmatpush1.msra.mxu0 0.0
    %592 = vmatprep.subr.mxu0 0.0
    %593 = vmatpush1.msra.mxu0 0.0
    %594 = vmatprep.subr.mxu0 0.0
    %595 = vmatpush1.msra.mxu0 0.0
    %596 = vmatprep.subr.mxu0 0.0
    %597 = vmatpush1.msra.mxu0 0.0
    %598 = vmatprep.subr.mxu0 0.0
    %599 = vmatpush1.msra.mxu0 0.0
    %600 = vmatprep.subr.mxu0 0.0
    %601 = vmatpush1.msra.mxu0 0.0
    %602 = vmatprep.subr.mxu0 0.0
    %603 = vmatpush1.msra.mxu0 0.0
    %604 = vmatprep.subr.mxu0 0.0
    %605 = vmatpush1.msra.mxu0 0.0
    %606 = vmatprep.subr.mxu0 0.0
    %607 = vmatpush1.msra.mxu0 0.0
    %608 = vmatprep.subr.mxu0 0.0
    %609 = vmatpush1.msra.mxu0 0.0
    %610 = vmatprep.subr.mxu0 0.0
    %611 = vmatpush1.msra.mxu0 0.0
    %612 = vmatprep.subr.mxu0 0.0
    %613 = vmatpush1.msra.mxu0 0.0
    %614 = vmatprep.subr.mxu0 0.0
    %615 = vmatpush1.msra.mxu0 0.0
    %616 = vmatprep.subr.mxu0 0.0
    %617 = vmatpush1.msra.mxu0 0.0
    %618 = vmatprep.subr.mxu0 0.0
    %619 = vmatpush1.msra.mxu0 0.0
    %620 = vmatprep.subr.mxu0 0.0
    %621 = vmatpush1.msra.mxu0 0.0
    %622 = vmatprep.mubr.f32.mxu0 0.0
    %623 = vmatmul.mubr.f32.gmra.mrb[0].mxu0 %v86
    %v624 = vpop.f32.mrb[0].mxu0
    %v625 = vadd.f32 0.0, %v624
    %v626 = vpop.f32.mrb[0].mxu0
    %627 = vmatprep.mubr.f32.mxu0 0.0
    %628 = vmatmul.mubr.f32.gmra.mrb[0].mxu0 %v89
    %v629 = vpop.f32.mrb[0].mxu0
    %v630 = vadd.f32 0.0, %v629
    %v631 = vpop.f32.mrb[0].mxu0
    %632 = vmatprep.mubr.f32.mxu0 0.0
    %633 = vmatmul.mubr.f32.gmra.mrb[0].mxu0 %v92
    %v634 = vpop.f32.mrb[0].mxu0
    %v635 = vadd.f32 0.0, %v634
    %v636 = vpop.f32.mrb[0].mxu0
    %637 = vmatprep.mubr.f32.mxu0 0.0
    %638 = vmatmul.mubr.f32.gmra.mrb[0].mxu0 %v95
    %v639 = vpop.f32.mrb[0].mxu0
    %v640 = vadd.f32 0.0, %v639
    %v641 = vpop.f32.mrb[0].mxu0
    %642 = vdwg.mxu0
    %647 = vrot.lane.b32.xlu0 %v518, 112
    %v648 = vpop.permute.xlu0 %647
    %649 = vrot.lane.b32.xlu0 %v519, 112
    %v650 = vpop.permute.xlu0 %649
    %651 = vrot.lane.b32.xlu0 %v520, 112
    %v652 = vpop.permute.xlu0 %651
    %653 = vrot.lane.b32.xlu0 %v521, 112
    %v654 = vpop.permute.xlu0 %653
    %655 = vrot.lane.b32.xlu0 %v518, 96
    %v656 = vpop.permute.xlu0 %655
    %657 = vrot.lane.b32.xlu0 %v519, 96
    %v658 = vpop.permute.xlu0 %657
    %659 = vrot.lane.b32.xlu0 %v520, 96
    %v660 = vpop.permute.xlu0 %659
    %661 = vrot.lane.b32.xlu0 %v521, 96
    %v662 = vpop.permute.xlu0 %661
    %663 = vrot.lane.b32.xlu0 %v518, 80
    %v664 = vpop.permute.xlu0 %663
    %665 = vrot.lane.b32.xlu0 %v519, 80
    %v666 = vpop.permute.xlu0 %665
    %667 = vrot.lane.b32.xlu0 %v520, 80
    %v668 = vpop.permute.xlu0 %667
    %669 = vrot.lane.b32.xlu0 %v521, 80
    %v670 = vpop.permute.xlu0 %669
    %675 = vrot.lane.b32.xlu0 %v546, 112
    %v676 = vpop.permute.xlu0 %675
    %677 = vrot.lane.b32.xlu0 %v547, 112
    %v678 = vpop.permute.xlu0 %677
    %679 = vrot.lane.b32.xlu0 %v548, 112
    %v680 = vpop.permute.xlu0 %679
    %681 = vrot.lane.b32.xlu0 %v549, 112
    %v682 = vpop.permute.xlu0 %681
    %683 = vrot.lane.b32.xlu0 %v546, 96
    %v684 = vpop.permute.xlu0 %683
    %685 = vrot.lane.b32.xlu0 %v547, 96
    %v686 = vpop.permute.xlu0 %685
    %687 = vrot.lane.b32.xlu0 %v548, 96
    %v688 = vpop.permute.xlu0 %687
    %689 = vrot.lane.b32.xlu0 %v549, 96
    %v690 = vpop.permute.xlu0 %689
    %691 = vrot.lane.b32.xlu0 %v546, 80
    %v692 = vpop.permute.xlu0 %691
    %693 = vrot.lane.b32.xlu0 %v547, 80
    %v694 = vpop.permute.xlu0 %693
    %695 = vrot.lane.b32.xlu0 %v548, 80
    %v696 = vpop.permute.xlu0 %695
    %697 = vrot.lane.b32.xlu0 %v549, 80
    %v698 = vpop.permute.xlu0 %697
    %703 = vrot.lane.b32.xlu0 %v625, 120
    %v704 = vpop.permute.xlu0 %703
    %705 = vrot.lane.b32.xlu0 %v630, 120
    %v706 = vpop.permute.xlu0 %705
    %707 = vrot.lane.b32.xlu0 %v635, 120
    %v708 = vpop.permute.xlu0 %707
    %709 = vrot.lane.b32.xlu0 %v640, 120
    %v710 = vpop.permute.xlu0 %709
    %715 = vrot.lane.b32.xlu0 %v625, 112
    %v716 = vpop.permute.xlu0 %715
    %717 = vrot.lane.b32.xlu0 %v630, 112
    %v718 = vpop.permute.xlu0 %717
    %719 = vrot.lane.b32.xlu0 %v635, 112
    %v720 = vpop.permute.xlu0 %719
    %721 = vrot.lane.b32.xlu0 %v640, 112
    %v722 = vpop.permute.xlu0 %721
    %727 = vrot.lane.b32.xlu0 %v625, 104
    %v728 = vpop.permute.xlu0 %727
    %729 = vrot.lane.b32.xlu0 %v630, 104
    %v730 = vpop.permute.xlu0 %729
    %731 = vrot.lane.b32.xlu0 %v635, 104
    %v732 = vpop.permute.xlu0 %731
    %733 = vrot.lane.b32.xlu0 %v640, 104
    %v734 = vpop.permute.xlu0 %733
    %v739 = vld [vmem:[%s9] sm:$0xff]
    %v740 = vld [vmem:[%s9 + $0x8] sm:$0xff]
    %v741 = vld [vmem:[%s9 + $0x10] sm:$0xff]
    %v742 = vld [vmem:[%s9 + $0x18] sm:$0xff]
    %v743 = vld [vmem:[%s9 + $0x20] sm:$0xff]
    %v744 = vld [vmem:[%s9 + $0x28] sm:$0xff]
    %v745 = vld [vmem:[%s9 + $0x30] sm:$0xff]
    %v746 = vld [vmem:[%s9 + $0x38] sm:$0xff]
    %v747 = vld [vmem:[%s9 + $0x40] sm:$0xff]
    %v748 = vld [vmem:[%s9 + $0x48] sm:$0xff]
    %v749 = vld [vmem:[%s9 + $0x50] sm:$0xff]
    %v750 = vld [vmem:[%s9 + $0x58] sm:$0xff]
    %v751 = vld [vmem:[%s9 + $0x60] sm:$0xff]
    %v752 = vld [vmem:[%s9 + $0x68] sm:$0xff]
    %v753 = vld [vmem:[%s9 + $0x70] sm:$0xff]
    %v754 = vld [vmem:[%s9 + $0x78] sm:$0xff]
    %vm755 = vcmask 130048
    %v756 = vsel %vm755, %v518, 0
    %v758 = vsel %vm755, %v519, 0
    %v760 = vsel %vm755, %v520, 0
    %v762 = vsel %vm755, %v521, 0
    %v764 = vsel %vm755, %v648, 0
    %v766 = vsel %vm755, %v650, 0
    %v768 = vsel %vm755, %v652, 0
    %v770 = vsel %vm755, %v654, 0
    %v772 = vsel %vm755, %v656, 0
    %v774 = vsel %vm755, %v658, 0
    %v776 = vsel %vm755, %v660, 0
    %v778 = vsel %vm755, %v662, 0
    %v780 = vsel %vm755, %v664, 0
    %v782 = vsel %vm755, %v666, 0
    %v784 = vsel %vm755, %v668, 0
    %v786 = vsel %vm755, %v670, 0
    %v788 = vsel %vm755, %v546, 0
    %v790 = vsel %vm755, %v547, 0
    %v792 = vsel %vm755, %v548, 0
    %v794 = vsel %vm755, %v549, 0
    %v796 = vsel %vm755, %v676, 0
    %v798 = vsel %vm755, %v678, 0
    %v800 = vsel %vm755, %v680, 0
    %v802 = vsel %vm755, %v682, 0
    %v804 = vsel %vm755, %v684, 0
    %v806 = vsel %vm755, %v686, 0
    %v808 = vsel %vm755, %v688, 0
    %v810 = vsel %vm755, %v690, 0
    %v812 = vsel %vm755, %v692, 0
    %v814 = vsel %vm755, %v694, 0
    %v816 = vsel %vm755, %v696, 0
    %v818 = vsel %vm755, %v698, 0
    %820 = vmatprep.subr.mxu0 0.0
    %821 = vmatpush1.xpose.msra.mxu0 %v788
    %822 = vmatprep.subr.mxu0 0.0
    %823 = vmatpush1.xpose.msra.mxu0 %v790
    %824 = vmatprep.subr.mxu0 0.0
    %825 = vmatpush1.xpose.msra.mxu0 %v792
    %826 = vmatprep.subr.mxu0 0.0
    %827 = vmatpush1.xpose.msra.mxu0 %v794
    %828 = vmatprep.subr.mxu0 0.0
    %829 = vmatpush1.xpose.msra.mxu0 %v796
    %830 = vmatprep.subr.mxu0 0.0
    %831 = vmatpush1.xpose.msra.mxu0 %v798
    %832 = vmatprep.subr.mxu0 0.0
    %833 = vmatpush1.xpose.msra.mxu0 %v800
    %834 = vmatprep.subr.mxu0 0.0
    %835 = vmatpush1.xpose.msra.mxu0 %v802
    %836 = vmatprep.subr.mxu0 0.0
    %837 = vmatpush1.xpose.msra.mxu0 %v804
    %838 = vmatprep.subr.mxu0 0.0
    %839 = vmatpush1.xpose.msra.mxu0 %v806
    %840 = vmatprep.subr.mxu0 0.0
    %841 = vmatpush1.xpose.msra.mxu0 %v808
    %842 = vmatprep.subr.mxu0 0.0
    %843 = vmatpush1.xpose.msra.mxu0 %v810
    %844 = vmatprep.subr.mxu0 0.0
    %845 = vmatpush1.xpose.msra.mxu0 %v812
    %846 = vmatprep.subr.mxu0 0.0
    %847 = vmatpush1.xpose.msra.mxu0 %v814
    %848 = vmatprep.subr.mxu0 0.0
    %849 = vmatpush1.xpose.msra.mxu0 %v816
    %850 = vmatprep.subr.mxu0 0.0
    %851 = vmatpush1.xpose.msra.mxu0 %v818
    %852 = vmatprep.subr.mxu0 0.0
    %853 = vmatpush1.xpose.msra.mxu0 0.0
    %854 = vmatprep.subr.mxu0 0.0
    %855 = vmatpush1.xpose.msra.mxu0 0.0
    %856 = vmatprep.subr.mxu0 0.0
    %857 = vmatpush1.xpose.msra.mxu0 0.0
    %858 = vmatprep.subr.mxu0 0.0
    %859 = vmatpush1.xpose.msra.mxu0 0.0
    %860 = vmatprep.subr.mxu0 0.0
    %861 = vmatpush1.xpose.msra.mxu0 0.0
    %862 = vmatprep.subr.mxu0 0.0
    %863 = vmatpush1.xpose.msra.mxu0 0.0
    %864 = vmatprep.subr.mxu0 0.0
    %865 = vmatpush1.xpose.msra.mxu0 0.0
    %866 = vmatprep.subr.mxu0 0.0
    %867 = vmatpush1.xpose.msra.mxu0 0.0
    %868 = vmatprep.subr.mxu0 0.0
    %869 = vmatpush1.xpose.msra.mxu0 0.0
    %870 = vmatprep.subr.mxu0 0.0
    %871 = vmatpush1.xpose.msra.mxu0 0.0
    %872 = vmatprep.subr.mxu0 0.0
    %873 = vmatpush1.xpose.msra.mxu0 0.0
    %874 = vmatprep.subr.mxu0 0.0
    %875 = vmatpush1.xpose.msra.mxu0 0.0
    %876 = vmatprep.subr.mxu0 0.0
    %877 = vmatpush1.xpose.msra.mxu0 0.0
    %878 = vmatprep.subr.mxu0 0.0
    %879 = vmatpush1.xpose.msra.mxu0 0.0
    %880 = vmatprep.subr.mxu0 0.0
    %881 = vmatpush1.xpose.msra.mxu0 0.0
    %882 = vmatprep.subr.mxu0 0.0
    %883 = vmatpush1.xpose.msra.mxu0 0.0
    %884 = vmatprep.mubr.f32.mxu0 0.0
    %885 = vmatmul.mubr.f32.gmra.mrb[0].mxu0 %v756
    %v886 = vpop.f32.mrb[0].mxu0
    %v887 = vadd.f32 %v739, %v886
    %v888 = vpop.f32.mrb[0].mxu0
    %889 = vmatprep.mubr.f32.mxu0 0.0
    %890 = vmatmul.mubr.f32.gmra.mrb[0].mxu0 %v758
    %v891 = vpop.f32.mrb[0].mxu0
    %v892 = vadd.f32 %v740, %v891
    %v893 = vpop.f32.mrb[0].mxu0
    %894 = vmatprep.mubr.f32.mxu0 0.0
    %895 = vmatmul.mubr.f32.gmra.mrb[0].mxu0 %v760
    %v896 = vpop.f32.mrb[0].mxu0
    %v897 = vadd.f32 %v741, %v896
    %v898 = vpop.f32.mrb[0].mxu0
    %899 = vmatprep.mubr.f32.mxu0 0.0
    %900 = vmatmul.mubr.f32.gmra.mrb[0].mxu0 %v762
    %v901 = vpop.f32.mrb[0].mxu0
    %v902 = vadd.f32 %v742, %v901
    %v903 = vpop.f32.mrb[0].mxu0
    %904 = vmatprep.mubr.f32.mxu0 0.0
    %905 = vmatmul.mubr.f32.gmra.mrb[0].mxu0 %v764
    %v906 = vpop.f32.mrb[0].mxu0
    %v907 = vadd.f32 %v743, %v906
    %v908 = vpop.f32.mrb[0].mxu0
    %909 = vmatprep.mubr.f32.mxu0 0.0
    %910 = vmatmul.mubr.f32.gmra.mrb[0].mxu0 %v766
    %v911 = vpop.f32.mrb[0].mxu0
    %v912 = vadd.f32 %v744, %v911
    %v913 = vpop.f32.mrb[0].mxu0
    %914 = vmatprep.mubr.f32.mxu0 0.0
    %915 = vmatmul.mubr.f32.gmra.mrb[0].mxu0 %v768
    %v916 = vpop.f32.mrb[0].mxu0
    %v917 = vadd.f32 %v745, %v916
    %v918 = vpop.f32.mrb[0].mxu0
    %919 = vmatprep.mubr.f32.mxu0 0.0
    %920 = vmatmul.mubr.f32.gmra.mrb[0].mxu0 %v770
    %v921 = vpop.f32.mrb[0].mxu0
    %v922 = vadd.f32 %v746, %v921
    %v923 = vpop.f32.mrb[0].mxu0
    %924 = vmatprep.mubr.f32.mxu0 0.0
    %925 = vmatmul.mubr.f32.gmra.mrb[0].mxu0 %v772
    %v926 = vpop.f32.mrb[0].mxu0
    %v927 = vadd.f32 %v747, %v926
    %v928 = vpop.f32.mrb[0].mxu0
    %929 = vmatprep.mubr.f32.mxu0 0.0
    %930 = vmatmul.mubr.f32.gmra.mrb[0].mxu0 %v774
    %v931 = vpop.f32.mrb[0].mxu0
    %v932 = vadd.f32 %v748, %v931
    %v933 = vpop.f32.mrb[0].mxu0
    %934 = vmatprep.mubr.f32.mxu0 0.0
    %935 = vmatmul.mubr.f32.gmra.mrb[0].mxu0 %v776
    %v936 = vpop.f32.mrb[0].mxu0
    %v937 = vadd.f32 %v749, %v936
    %v938 = vpop.f32.mrb[0].mxu0
    %939 = vmatprep.mubr.f32.mxu0 0.0
    %940 = vmatmul.mubr.f32.gmra.mrb[0].mxu0 %v778
    %v941 = vpop.f32.mrb[0].mxu0
    %v942 = vadd.f32 %v750, %v941
    %v943 = vpop.f32.mrb[0].mxu0
    %944 = vmatprep.mubr.f32.mxu0 0.0
    %945 = vmatmul.mubr.f32.gmra.mrb[0].mxu0 %v780
    %v946 = vpop.f32.mrb[0].mxu0
    %v947 = vadd.f32 %v751, %v946
    %v948 = vpop.f32.mrb[0].mxu0
    %949 = vmatprep.mubr.f32.mxu0 0.0
    %950 = vmatmul.mubr.f32.gmra.mrb[0].mxu0 %v782
    %v951 = vpop.f32.mrb[0].mxu0
    %v952 = vadd.f32 %v752, %v951
    %v953 = vpop.f32.mrb[0].mxu0
    %954 = vmatprep.mubr.f32.mxu0 0.0
    %955 = vmatmul.mubr.f32.gmra.mrb[0].mxu0 %v784
    %v956 = vpop.f32.mrb[0].mxu0
    %v957 = vadd.f32 %v753, %v956
    %v958 = vpop.f32.mrb[0].mxu0
    %959 = vmatprep.mubr.f32.mxu0 0.0
    %960 = vmatmul.mubr.f32.gmra.mrb[0].mxu0 %v786
    %v961 = vpop.f32.mrb[0].mxu0
    %v962 = vadd.f32 %v754, %v961
    %v963 = vpop.f32.mrb[0].mxu0
    %964 = vdwg.mxu0
    %965 = vmax.xlane.f32.xlu0 %v887
    %v966 = vpop.xlane.xlu0 %965
    %967 = vmax.xlane.f32.xlu0 %v892
    %v968 = vpop.xlane.xlu0 %967
    %969 = vmax.xlane.f32.xlu0 %v897
    %v970 = vpop.xlane.xlu0 %969
    %971 = vmax.xlane.f32.xlu0 %v902
    %v972 = vpop.xlane.xlu0 %971
    %973 = vmax.xlane.f32.xlu0 %v907
    %v974 = vpop.xlane.xlu0 %973
    %975 = vmax.xlane.f32.xlu0 %v912
    %v976 = vpop.xlane.xlu0 %975
    %977 = vmax.xlane.f32.xlu0 %v917
    %v978 = vpop.xlane.xlu0 %977
    %979 = vmax.xlane.f32.xlu0 %v922
    %v980 = vpop.xlane.xlu0 %979
    %981 = vmax.xlane.f32.xlu0 %v927
    %v982 = vpop.xlane.xlu0 %981
    %983 = vmax.xlane.f32.xlu0 %v932
    %v984 = vpop.xlane.xlu0 %983
    %985 = vmax.xlane.f32.xlu0 %v937
    %v986 = vpop.xlane.xlu0 %985
    %987 = vmax.xlane.f32.xlu0 %v942
    %v988 = vpop.xlane.xlu0 %987
    %989 = vmax.xlane.f32.xlu0 %v947
    %v990 = vpop.xlane.xlu0 %989
    %991 = vmax.xlane.f32.xlu0 %v952
    %v992 = vpop.xlane.xlu0 %991
    %993 = vmax.xlane.f32.xlu0 %v957
    %v994 = vpop.xlane.xlu0 %993
    %995 = vmax.xlane.f32.xlu0 %v962
    %v996 = vpop.xlane.xlu0 %995
    %v997 = vsub.f32 %v887, %v966
    %v998 = vsub.f32 %v892, %v968
    %v999 = vsub.f32 %v897, %v970
    %v1000 = vsub.f32 %v902, %v972
    %v1001 = vsub.f32 %v907, %v974
    %v1002 = vsub.f32 %v912, %v976
    %v1003 = vsub.f32 %v917, %v978
    %v1004 = vsub.f32 %v922, %v980
    %v1005 = vsub.f32 %v927, %v982
    %v1006 = vsub.f32 %v932, %v984
    %v1007 = vsub.f32 %v937, %v986
    %v1008 = vsub.f32 %v942, %v988
    %v1009 = vsub.f32 %v947, %v990
    %v1010 = vsub.f32 %v952, %v992
    %v1011 = vsub.f32 %v957, %v994
    %v1012 = vsub.f32 %v962, %v996
    %v1013 = vmul.f32 %v997, 1.442695
    %v1014 = vpow.pop %v1013
    %v1015 = vmul.f32 %v998, 1.442695
    %v1016 = vpow.pop %v1015
    %v1017 = vmul.f32 %v999, 1.442695
    %v1018 = vpow.pop %v1017
    %v1019 = vmul.f32 %v1000, 1.442695
    %v1020 = vpow.pop %v1019
    %v1021 = vmul.f32 %v1001, 1.442695
    %v1022 = vpow.pop %v1021
    %v1023 = vmul.f32 %v1002, 1.442695
    %v1024 = vpow.pop %v1023
    %v1025 = vmul.f32 %v1003, 1.442695
    %v1026 = vpow.pop %v1025
    %v1027 = vmul.f32 %v1004, 1.442695
    %v1028 = vpow.pop %v1027
    %v1029 = vmul.f32 %v1005, 1.442695
    %v1030 = vpow.pop %v1029
    %v1031 = vmul.f32 %v1006, 1.442695
    %v1032 = vpow.pop %v1031
    %v1033 = vmul.f32 %v1007, 1.442695
    %v1034 = vpow.pop %v1033
    %v1035 = vmul.f32 %v1008, 1.442695
    %v1036 = vpow.pop %v1035
    %v1037 = vmul.f32 %v1009, 1.442695
    %v1038 = vpow.pop %v1037
    %v1039 = vmul.f32 %v1010, 1.442695
    %v1040 = vpow.pop %v1039
    %v1041 = vmul.f32 %v1011, 1.442695
    %v1042 = vpow.pop %v1041
    %v1043 = vmul.f32 %v1012, 1.442695
    %v1044 = vpow.pop %v1043
    %1045 = vadd.xlane.f32.xlu0 %v1014
    %v1046 = vpop.xlane.xlu0 %1045
    %1047 = vadd.xlane.f32.xlu0 %v1016
    %v1048 = vpop.xlane.xlu0 %1047
    %1049 = vadd.xlane.f32.xlu0 %v1018
    %v1050 = vpop.xlane.xlu0 %1049
    %1051 = vadd.xlane.f32.xlu0 %v1020
    %v1052 = vpop.xlane.xlu0 %1051
    %1053 = vadd.xlane.f32.xlu0 %v1022
    %v1054 = vpop.xlane.xlu0 %1053
    %1055 = vadd.xlane.f32.xlu0 %v1024
    %v1056 = vpop.xlane.xlu0 %1055
    %1057 = vadd.xlane.f32.xlu0 %v1026
    %v1058 = vpop.xlane.xlu0 %1057
    %1059 = vadd.xlane.f32.xlu0 %v1028
    %v1060 = vpop.xlane.xlu0 %1059
    %1061 = vadd.xlane.f32.xlu0 %v1030
    %v1062 = vpop.xlane.xlu0 %1061
    %1063 = vadd.xlane.f32.xlu0 %v1032
    %v1064 = vpop.xlane.xlu0 %1063
    %1065 = vadd.xlane.f32.xlu0 %v1034
    %v1066 = vpop.xlane.xlu0 %1065
    %1067 = vadd.xlane.f32.xlu0 %v1036
    %v1068 = vpop.xlane.xlu0 %1067
    %1069 = vadd.xlane.f32.xlu0 %v1038
    %v1070 = vpop.xlane.xlu0 %1069
    %1071 = vadd.xlane.f32.xlu0 %v1040
    %v1072 = vpop.xlane.xlu0 %1071
    %1073 = vadd.xlane.f32.xlu0 %v1042
    %v1074 = vpop.xlane.xlu0 %1073
    %1075 = vadd.xlane.f32.xlu0 %v1044
    %v1076 = vpop.xlane.xlu0 %1075
    %v1077 = vrcp.pop %v1046
    %v1078 = vrcp.pop %v1048
    %v1079 = vrcp.pop %v1050
    %v1080 = vrcp.pop %v1052
    %v1081 = vrcp.pop %v1054
    %v1082 = vrcp.pop %v1056
    %v1083 = vrcp.pop %v1058
    %v1084 = vrcp.pop %v1060
    %v1085 = vrcp.pop %v1062
    %v1086 = vrcp.pop %v1064
    %v1087 = vrcp.pop %v1066
    %v1088 = vrcp.pop %v1068
    %v1089 = vrcp.pop %v1070
    %v1090 = vrcp.pop %v1072
    %v1091 = vrcp.pop %v1074
    %v1092 = vrcp.pop %v1076
    %v1093 = vmul.f32 %v1046, %v1077
    %v1094 = vmul.f32 %v1048, %v1078
    %v1095 = vmul.f32 %v1050, %v1079
    %v1096 = vmul.f32 %v1052, %v1080
    %v1097 = vmul.f32 %v1054, %v1081
    %v1098 = vmul.f32 %v1056, %v1082
    %v1099 = vmul.f32 %v1058, %v1083
    %v1100 = vmul.f32 %v1060, %v1084
    %v1101 = vmul.f32 %v1062, %v1085
    %v1102 = vmul.f32 %v1064, %v1086
    %v1103 = vmul.f32 %v1066, %v1087
    %v1104 = vmul.f32 %v1068, %v1088
    %v1105 = vmul.f32 %v1070, %v1089
    %v1106 = vmul.f32 %v1072, %v1090
    %v1107 = vmul.f32 %v1074, %v1091
    %v1108 = vmul.f32 %v1076, %v1092
    %v1109 = vsub.f32 2.0, %v1093
    %v1110 = vsub.f32 2.0, %v1094
    %v1111 = vsub.f32 2.0, %v1095
    %v1112 = vsub.f32 2.0, %v1096
    %v1113 = vsub.f32 2.0, %v1097
    %v1114 = vsub.f32 2.0, %v1098
    %v1115 = vsub.f32 2.0, %v1099
    %v1116 = vsub.f32 2.0, %v1100
    %v1117 = vsub.f32 2.0, %v1101
    %v1118 = vsub.f32 2.0, %v1102
    %v1119 = vsub.f32 2.0, %v1103
    %v1120 = vsub.f32 2.0, %v1104
    %v1121 = vsub.f32 2.0, %v1105
    %v1122 = vsub.f32 2.0, %v1106
    %v1123 = vsub.f32 2.0, %v1107
    %v1124 = vsub.f32 2.0, %v1108
    %v1125 = vmul.f32 %v1077, %v1109
    %v1126 = vmul.f32 %v1078, %v1110
    %v1127 = vmul.f32 %v1079, %v1111
    %v1128 = vmul.f32 %v1080, %v1112
    %v1129 = vmul.f32 %v1081, %v1113
    %v1130 = vmul.f32 %v1082, %v1114
    %v1131 = vmul.f32 %v1083, %v1115
    %v1132 = vmul.f32 %v1084, %v1116
    %v1133 = vmul.f32 %v1085, %v1117
    %v1134 = vmul.f32 %v1086, %v1118
    %v1135 = vmul.f32 %v1087, %v1119
    %v1136 = vmul.f32 %v1088, %v1120
    %v1137 = vmul.f32 %v1089, %v1121
    %v1138 = vmul.f32 %v1090, %v1122
    %v1139 = vmul.f32 %v1091, %v1123
    %v1140 = vmul.f32 %v1092, %v1124
    %v1141 = vmul.f32 %v1014, %v1125
    %v1142 = vmul.f32 %v1016, %v1126
    %v1143 = vmul.f32 %v1018, %v1127
    %v1144 = vmul.f32 %v1020, %v1128
    %v1145 = vmul.f32 %v1022, %v1129
    %v1146 = vmul.f32 %v1024, %v1130
    %v1147 = vmul.f32 %v1026, %v1131
    %v1148 = vmul.f32 %v1028, %v1132
    %v1149 = vmul.f32 %v1030, %v1133
    %v1150 = vmul.f32 %v1032, %v1134
    %v1151 = vmul.f32 %v1034, %v1135
    %v1152 = vmul.f32 %v1036, %v1136
    %v1153 = vmul.f32 %v1038, %v1137
    %v1154 = vmul.f32 %v1040, %v1138
    %v1155 = vmul.f32 %v1042, %v1139
    %v1156 = vmul.f32 %v1044, %v1140
    %1157 = vmatprep.subr.mxu0 0.0
    %1158 = vmatpush1.msra.mxu0 %v625
    %1159 = vmatprep.subr.mxu0 0.0
    %1160 = vmatpush1.msra.mxu0 %v630
    %1161 = vmatprep.subr.mxu0 0.0
    %1162 = vmatpush1.msra.mxu0 %v635
    %1163 = vmatprep.subr.mxu0 0.0
    %1164 = vmatpush1.msra.mxu0 %v640
    %1165 = vmatprep.subr.mxu0 0.0
    %1166 = vmatpush1.msra.mxu0 %v704
    %1167 = vmatprep.subr.mxu0 0.0
    %1168 = vmatpush1.msra.mxu0 %v706
    %1169 = vmatprep.subr.mxu0 0.0
    %1170 = vmatpush1.msra.mxu0 %v708
    %1171 = vmatprep.subr.mxu0 0.0
    %1172 = vmatpush1.msra.mxu0 %v710
    %1173 = vmatprep.subr.mxu0 0.0
    %1174 = vmatpush1.msra.mxu0 %v716
    %1175 = vmatprep.subr.mxu0 0.0
    %1176 = vmatpush1.msra.mxu0 %v718
    %1177 = vmatprep.subr.mxu0 0.0
    %1178 = vmatpush1.msra.mxu0 %v720
    %1179 = vmatprep.subr.mxu0 0.0
    %1180 = vmatpush1.msra.mxu0 %v722
    %1181 = vmatprep.subr.mxu0 0.0
    %1182 = vmatpush1.msra.mxu0 %v728
    %1183 = vmatprep.subr.mxu0 0.0
    %1184 = vmatpush1.msra.mxu0 %v730
    %1185 = vmatprep.subr.mxu0 0.0
    %1186 = vmatpush1.msra.mxu0 %v732
    %1187 = vmatprep.subr.mxu0 0.0
    %1188 = vmatpush1.msra.mxu0 %v734
    %1189 = vmatprep.subr.mxu0 0.0
    %1190 = vmatpush1.msra.mxu0 0.0
    %1191 = vmatprep.subr.mxu0 0.0
    %1192 = vmatpush1.msra.mxu0 0.0
    %1193 = vmatprep.subr.mxu0 0.0
    %1194 = vmatpush1.msra.mxu0 0.0
    %1195 = vmatprep.subr.mxu0 0.0
    %1196 = vmatpush1.msra.mxu0 0.0
    %1197 = vmatprep.subr.mxu0 0.0
    %1198 = vmatpush1.msra.mxu0 0.0
    %1199 = vmatprep.subr.mxu0 0.0
    %1200 = vmatpush1.msra.mxu0 0.0
    %1201 = vmatprep.subr.mxu0 0.0
    %1202 = vmatpush1.msra.mxu0 0.0
    %1203 = vmatprep.subr.mxu0 0.0
    %1204 = vmatpush1.msra.mxu0 0.0
    %1205 = vmatprep.subr.mxu0 0.0
    %1206 = vmatpush1.msra.mxu0 0.0
    %1207 = vmatprep.subr.mxu0 0.0
    %1208 = vmatpush1.msra.mxu0 0.0
    %1209 = vmatprep.subr.mxu0 0.0
    %1210 = vmatpush1.msra.mxu0 0.0
    %1211 = vmatprep.subr.mxu0 0.0
    %1212 = vmatpush1.msra.mxu0 0.0
    %1213 = vmatprep.subr.mxu0 0.0
    %1214 = vmatpush1.msra.mxu0 0.0
    %1215 = vmatprep.subr.mxu0 0.0
    %1216 = vmatpush1.msra.mxu0 0.0
    %1217 = vmatprep.subr.mxu0 0.0
    %1218 = vmatpush1.msra.mxu0 0.0
    %1219 = vmatprep.subr.mxu0 0.0
    %1220 = vmatpush1.msra.mxu0 0.0
    %1221 = vmatprep.mubr.f32.mxu0 0.0
    %1222 = vmatmul.mubr.f32.gmra.mrb[0].mxu0 %v1141
    %v1223 = vpop.f32.mrb[0].mxu0
    %v1224 = vadd.f32 0.0, %v1223
    %v1225 = vpop.f32.mrb[0].mxu0
    %1226 = vmatprep.mubr.f32.mxu0 0.0
    %1227 = vmatmul.mubr.f32.gmra.mrb[0].mxu0 %v1142
    %v1228 = vpop.f32.mrb[0].mxu0
    %v1229 = vadd.f32 0.0, %v1228
    %v1230 = vpop.f32.mrb[0].mxu0
    %1231 = vmatprep.mubr.f32.mxu0 0.0
    %1232 = vmatmul.mubr.f32.gmra.mrb[0].mxu0 %v1143
    %v1233 = vpop.f32.mrb[0].mxu0
    %v1234 = vadd.f32 0.0, %v1233
    %v1235 = vpop.f32.mrb[0].mxu0
    %1236 = vmatprep.mubr.f32.mxu0 0.0
    %1237 = vmatmul.mubr.f32.gmra.mrb[0].mxu0 %v1144
    %v1238 = vpop.f32.mrb[0].mxu0
    %v1239 = vadd.f32 0.0, %v1238
    %v1240 = vpop.f32.mrb[0].mxu0
    %1241 = vmatprep.mubr.f32.mxu0 0.0
    %1242 = vmatmul.mubr.f32.gmra.mrb[0].mxu0 %v1145
    %v1243 = vpop.f32.mrb[0].mxu0
    %v1244 = vadd.f32 0.0, %v1243
    %v1245 = vpop.f32.mrb[0].mxu0
    %1246 = vmatprep.mubr.f32.mxu0 0.0
    %1247 = vmatmul.mubr.f32.gmra.mrb[0].mxu0 %v1146
    %v1248 = vpop.f32.mrb[0].mxu0
    %v1249 = vadd.f32 0.0, %v1248
    %v1250 = vpop.f32.mrb[0].mxu0
    %1251 = vmatprep.mubr.f32.mxu0 0.0
    %1252 = vmatmul.mubr.f32.gmra.mrb[0].mxu0 %v1147
    %v1253 = vpop.f32.mrb[0].mxu0
    %v1254 = vadd.f32 0.0, %v1253
    %v1255 = vpop.f32.mrb[0].mxu0
    %1256 = vmatprep.mubr.f32.mxu0 0.0
    %1257 = vmatmul.mubr.f32.gmra.mrb[0].mxu0 %v1148
    %v1258 = vpop.f32.mrb[0].mxu0
    %v1259 = vadd.f32 0.0, %v1258
    %v1260 = vpop.f32.mrb[0].mxu0
    %1261 = vmatprep.mubr.f32.mxu0 0.0
    %1262 = vmatmul.mubr.f32.gmra.mrb[0].mxu0 %v1149
    %v1263 = vpop.f32.mrb[0].mxu0
    %v1264 = vadd.f32 0.0, %v1263
    %v1265 = vpop.f32.mrb[0].mxu0
    %1266 = vmatprep.mubr.f32.mxu0 0.0
    %1267 = vmatmul.mubr.f32.gmra.mrb[0].mxu0 %v1150
    %v1268 = vpop.f32.mrb[0].mxu0
    %v1269 = vadd.f32 0.0, %v1268
    %v1270 = vpop.f32.mrb[0].mxu0
    %1271 = vmatprep.mubr.f32.mxu0 0.0
    %1272 = vmatmul.mubr.f32.gmra.mrb[0].mxu0 %v1151
    %v1273 = vpop.f32.mrb[0].mxu0
    %v1274 = vadd.f32 0.0, %v1273
    %v1275 = vpop.f32.mrb[0].mxu0
    %1276 = vmatprep.mubr.f32.mxu0 0.0
    %1277 = vmatmul.mubr.f32.gmra.mrb[0].mxu0 %v1152
    %v1278 = vpop.f32.mrb[0].mxu0
    %v1279 = vadd.f32 0.0, %v1278
    %v1280 = vpop.f32.mrb[0].mxu0
    %1281 = vmatprep.mubr.f32.mxu0 0.0
    %1282 = vmatmul.mubr.f32.gmra.mrb[0].mxu0 %v1153
    %v1283 = vpop.f32.mrb[0].mxu0
    %v1284 = vadd.f32 0.0, %v1283
    %v1285 = vpop.f32.mrb[0].mxu0
    %1286 = vmatprep.mubr.f32.mxu0 0.0
    %1287 = vmatmul.mubr.f32.gmra.mrb[0].mxu0 %v1154
    %v1288 = vpop.f32.mrb[0].mxu0
    %v1289 = vadd.f32 0.0, %v1288
    %v1290 = vpop.f32.mrb[0].mxu0
    %1291 = vmatprep.mubr.f32.mxu0 0.0
    %1292 = vmatmul.mubr.f32.gmra.mrb[0].mxu0 %v1155
    %v1293 = vpop.f32.mrb[0].mxu0
    %v1294 = vadd.f32 0.0, %v1293
    %v1295 = vpop.f32.mrb[0].mxu0
    %1296 = vmatprep.mubr.f32.mxu0 0.0
    %1297 = vmatmul.mubr.f32.gmra.mrb[0].mxu0 %v1156
    %v1298 = vpop.f32.mrb[0].mxu0
    %v1299 = vadd.f32 0.0, %v1298
    %v1300 = vpop.f32.mrb[0].mxu0
    %1301 = vdwg.mxu0
    %1306 = vrot.lane.b32.xlu0 %v1244, 8
    %v1307 = vpop.permute.xlu0 %1306
    %1308 = vrot.lane.b32.xlu0 %v1249, 8
    %v1309 = vpop.permute.xlu0 %1308
    %1310 = vrot.lane.b32.xlu0 %v1254, 8
    %v1311 = vpop.permute.xlu0 %1310
    %1312 = vrot.lane.b32.xlu0 %v1259, 8
    %v1313 = vpop.permute.xlu0 %1312
    %1322 = vrot.lane.b32.xlu0 %v1264, 16
    %v1323 = vpop.permute.xlu0 %1322
    %1324 = vrot.lane.b32.xlu0 %v1269, 16
    %v1325 = vpop.permute.xlu0 %1324
    %1326 = vrot.lane.b32.xlu0 %v1274, 16
    %v1327 = vpop.permute.xlu0 %1326
    %1328 = vrot.lane.b32.xlu0 %v1279, 16
    %v1329 = vpop.permute.xlu0 %1328
    %1338 = vrot.lane.b32.xlu0 %v1284, 24
    %v1339 = vpop.permute.xlu0 %1338
    %1340 = vrot.lane.b32.xlu0 %v1289, 24
    %v1341 = vpop.permute.xlu0 %1340
    %1342 = vrot.lane.b32.xlu0 %v1294, 24
    %v1343 = vpop.permute.xlu0 %1342
    %1344 = vrot.lane.b32.xlu0 %v1299, 24
    %v1345 = vpop.permute.xlu0 %1344
    %vm1350 = vcmask 64512
    %v1351 = vsel %vm1350, %v1224, %v1307
    %v1352 = vsel %vm1350, %v1229, %v1309
    %v1353 = vsel %vm1350, %v1234, %v1311
    %v1354 = vsel %vm1350, %v1239, %v1313
    %v1355 = vsel %vm755, %v1351, %v1323
    %v1356 = vsel %vm755, %v1352, %v1325
    %v1357 = vsel %vm755, %v1353, %v1327
    %v1358 = vsel %vm755, %v1354, %v1329
    %vm1359 = vcmask 195584
    %v1360 = vsel %vm1359, %v1355, %v1339
    %v1361 = vsel %vm1359, %v1356, %v1341
    %v1362 = vsel %vm1359, %v1357, %v1343
    %v1363 = vsel %vm1359, %v1358, %v1345
    %v1364 = vld [vmem:[#allocation2] sm:$0xff]
    %v1365 = vld [vmem:[#allocation2 + $0x8] sm:$0xff]
    %v1366 = vld [vmem:[#allocation2 + $0x10] sm:$0xff]
    %v1367 = vld [vmem:[#allocation2 + $0x18] sm:$0xff]
    %v1369 = vsel %vm279, %v1360, 0
    %v1372 = vsel %vm279, %v1361, 0
    %v1375 = vsel %vm279, %v1362, 0
    %v1378 = vsel %vm279, %v1363, 0
    %1380 = vmatprep.subr.mxu0 0.0
    %1381 = vmatpush1.msra.mxu0 %v1364
    %1382 = vmatprep.subr.mxu0 0.0
    %1383 = vmatpush1.msra.mxu0 %v1365
    %1384 = vmatprep.subr.mxu0 0.0
    %1385 = vmatpush1.msra.mxu0 %v1366
    %1386 = vmatprep.subr.mxu0 0.0
    %1387 = vmatpush1.msra.mxu0 %v1367
    %1388 = vmatprep.subr.mxu0 0.0
    %1389 = vmatpush1.msra.mxu0 0.0
    %1390 = vmatprep.subr.mxu0 0.0
    %1391 = vmatpush1.msra.mxu0 0.0
    %1392 = vmatprep.subr.mxu0 0.0
    %1393 = vmatpush1.msra.mxu0 0.0
    %1394 = vmatprep.subr.mxu0 0.0
    %1395 = vmatpush1.msra.mxu0 0.0
    %1396 = vmatprep.subr.mxu0 0.0
    %1397 = vmatpush1.msra.mxu0 0.0
    %1398 = vmatprep.subr.mxu0 0.0
    %1399 = vmatpush1.msra.mxu0 0.0
    %1400 = vmatprep.subr.mxu0 0.0
    %1401 = vmatpush1.msra.mxu0 0.0
    %1402 = vmatprep.subr.mxu0 0.0
    %1403 = vmatpush1.msra.mxu0 0.0
    %1404 = vmatprep.subr.mxu0 0.0
    %1405 = vmatpush1.msra.mxu0 0.0
    %1406 = vmatprep.subr.mxu0 0.0
    %1407 = vmatpush1.msra.mxu0 0.0
    %1408 = vmatprep.subr.mxu0 0.0
    %1409 = vmatpush1.msra.mxu0 0.0
    %1410 = vmatprep.subr.mxu0 0.0
    %1411 = vmatpush1.msra.mxu0 0.0
    %1412 = vmatprep.subr.mxu0 0.0
    %1413 = vmatpush1.msra.mxu0 0.0
    %1414 = vmatprep.subr.mxu0 0.0
    %1415 = vmatpush1.msra.mxu0 0.0
    %1416 = vmatprep.subr.mxu0 0.0
    %1417 = vmatpush1.msra.mxu0 0.0
    %1418 = vmatprep.subr.mxu0 0.0
    %1419 = vmatpush1.msra.mxu0 0.0
    %1420 = vmatprep.subr.mxu0 0.0
    %1421 = vmatpush1.msra.mxu0 0.0
    %1422 = vmatprep.subr.mxu0 0.0
    %1423 = vmatpush1.msra.mxu0 0.0
    %1424 = vmatprep.subr.mxu0 0.0
    %1425 = vmatpush1.msra.mxu0 0.0
    %1426 = vmatprep.subr.mxu0 0.0
    %1427 = vmatpush1.msra.mxu0 0.0
    %1428 = vmatprep.subr.mxu0 0.0
    %1429 = vmatpush1.msra.mxu0 0.0
    %1430 = vmatprep.subr.mxu0 0.0
    %1431 = vmatpush1.msra.mxu0 0.0
    %1432 = vmatprep.subr.mxu0 0.0
    %1433 = vmatpush1.msra.mxu0 0.0
    %1434 = vmatprep.subr.mxu0 0.0
    %1435 = vmatpush1.msra.mxu0 0.0
    %1436 = vmatprep.subr.mxu0 0.0
    %1437 = vmatpush1.msra.mxu0 0.0
    %1438 = vmatprep.subr.mxu0 0.0
    %1439 = vmatpush1.msra.mxu0 0.0
    %1440 = vmatprep.subr.mxu0 0.0
    %1441 = vmatpush1.msra.mxu0 0.0
    %1442 = vmatprep.subr.mxu0 0.0
    %1443 = vmatpush1.msra.mxu0 0.0
    %1444 = vmatprep.mubr.f32.mxu0 0.0
    %1445 = vmatmul.mubr.f32.gmra.mrb[0].mxu0 %v1369
    %v1446 = vpop.f32.mrb[0].mxu0
    %v1447 = vadd.f32 0.0, %v1446
    %v1448 = vpop.f32.mrb[0].mxu0
    %1449 = vmatprep.mubr.f32.mxu0 0.0
    %1450 = vmatmul.mubr.f32.gmra.mrb[0].mxu0 %v1372
    %v1451 = vpop.f32.mrb[0].mxu0
    %v1452 = vadd.f32 0.0, %v1451
    %v1453 = vpop.f32.mrb[0].mxu0
    %1454 = vmatprep.mubr.f32.mxu0 0.0
    %1455 = vmatmul.mubr.f32.gmra.mrb[0].mxu0 %v1375
    %v1456 = vpop.f32.mrb[0].mxu0
    %v1457 = vadd.f32 0.0, %v1456
    %v1458 = vpop.f32.mrb[0].mxu0
    %1459 = vmatprep.mubr.f32.mxu0 0.0
    %1460 = vmatmul.mubr.f32.gmra.mrb[0].mxu0 %v1378
    %v1461 = vpop.f32.mrb[0].mxu0
    %v1462 = vadd.f32 0.0, %v1461
    %v1463 = vpop.f32.mrb[0].mxu0
    %1464 = vdwg.mxu0
    %1465 = vst.msk [vmem:[#allocation7] sm:$0xff] %vm84, %v1447
    %1466 = vst.msk [vmem:[#allocation7 + $0x8] sm:$0xff] %vm84, %v1452
    %1467 = vst.msk [vmem:[#allocation7 + $0x10] sm:$0xff] %vm84, %v1457
    %1468 = vst.msk [vmem:[#allocation7 + $0x18] sm:$0xff] %vm84, %v1462
    // Predicated region
    $region50: #{llama_attention_pallas.1} parent=1 // pred_check
      _
    $region51: #{llama_attention_pallas.1} parent=1 // pred_check_branch
      %1470 = sbr.rel (0) target = $region53
    $region52: #{llama_attention_pallas.1} parent=1 // pred_region
      %s1472 = ssub.s32 512, 512
      %1473 = vsyncadd [#allocation4], %s1472
      %s1474 = sshll.u32 [#allocation7], 4
      %s1475 = int_to_ptr.vmem [resolvable:$true] %s1474
      %1480 = dma.vmem_to_hbm [thread:$0]  %s1475, 512, %s10, [#allocation4], 128, 128, 8
    $region53: #{llama_attention_pallas.1} parent=1 // pred_fallthru
      _
    // Predicated region
    $region54: #{llama_attention_pallas.1} parent=1 // pred_check
      _
    $region55: #{llama_attention_pallas.1} parent=1 // pred_check_branch
      %1482 = sbr.rel (0) target = $region57
    $region56: #{llama_attention_pallas.1} parent=1 // pred_region
      %1483 = dma.done [#allocation4], 512
    $region57: #{llama_attention_pallas.1} parent=1 // pred_fallthru
      _
    %1484 = vsyncpa [#allocation3], 1
    %1485 = vsyncpa [#allocation6], 1
    %1486 = vsyncpa [#allocation4], 1

</llo_original>
